<compile_context>
chip_gen: v7x
topology: tpu7x:2x2x1
jax: 0.10.0
libtpu: 0.0.40
codegen_flags: <defaults>
</compile_context>

<pallas_src>
import math
import functools
import numpy as np
import jax
import jax.numpy as jnp
from jax.experimental import pallas as pl
from jax.experimental.pallas import tpu as pltpu


def _round_up(x, m):
    return ((x + m - 1) // m) * m


def _default_max_tile():
    # v7x: 64 MiB physical VMEM -> budget tiles tighter; v5e/v6e: 128 MiB.
    try:
        info = pltpu.get_tpu_info()
        vmem = getattr(info, "vmem_capacity_bytes", None)
        if vmem is not None and vmem <= (64 << 20):
            return 2048
    except Exception:
        pass
    return 4096


def _pick_channel_blocks(n_batch, channels):
    # Give v7x's second TensorCore work when the batch axis is too narrow.
    if n_batch >= 2:
        return 1
    return 2 if channels % 16 == 0 else 1


# ---------------------------------------------------------------------------
# Pallas kernels
# ---------------------------------------------------------------------------
def _spp_bn_pool_kernel(x_ref, wt_ref, shift_ref, pw_ref, ph_ref,
                        x0_ref, pooled_ref):
    """spp_bn: relu(W^T @ x + shift), channel-major / lane-dense, plus fused
    factorized adaptive-average-pooling partial sums for every pyramid level."""
    j = pl.program_id(2)

    @pl.when(j == 0)
    def _():
        pooled_ref[...] = jnp.zeros_like(pooled_ref)

    # (cb, cin) @ (cin, t_hw) -> (cb, t_hw); bf16 operands, f32 accumulate.
    y = jnp.dot(wt_ref[...], x_ref[0], preferred_element_type=jnp.float32)
    y = jnp.maximum(y + shift_ref[...], 0.0)
    y16 = y.astype(jnp.bfloat16)          # cast once: reused for store + pooling
    x0_ref[0] = y16

    # Factorized adaptive pooling: width first with the VMEM-resident
    # kron(I_R, aw) operator, then the tiny per-tile row operator; the result
    # is accumulated in the resident pooled block across spatial tiles.
    yw = jnp.dot(y16, pw_ref[...], preferred_element_type=jnp.float32)     # (cb, R*Gw)
    pooled_ref[0] = pooled_ref[0] + jnp.dot(
        yw, ph_ref[0], preferred_element_type=jnp.float32)                 # (cb, Gh*Gw)


def _fuse_kernel(x0_ref, w0t_ref, zc_ref, uh_ref, uw_ref, shift_ref, o_ref):
    """spp_fuse without materializing the channel concat / upsampled levels:
    relu(W0^T @ x0 + (Z @ Uh_j) @ Uw + shift)."""
    acc = jnp.dot(w0t_ref[...], x0_ref[0], preferred_element_type=jnp.float32)
    # Row-upsample the (tiny, block-diagonal) fuse-contracted pyramid, then
    # width-upsample with the VMEM-resident kron(I_R, bw^T) operator.
    zh = jnp.dot(zc_ref[0], uh_ref[0], preferred_element_type=jnp.float32)  # (ob, R*Gw)
    acc = acc + jnp.dot(zh.astype(jnp.bfloat16), uw_ref[...],
                        preferred_element_type=jnp.float32)                 # (ob, t_hw)
    o_ref[0] = jnp.maximum(acc + shift_ref[...], 0.0).astype(o_ref.dtype)


# ---------------------------------------------------------------------------
# Pallas wrappers
# ---------------------------------------------------------------------------
def _spp_bn_pool(x_pix, wt, shift, pw, ph, *, t_hw, n_cb, ghgw):
    """x_pix: (N, cin, HWp) bf16; wt: (cout, cin) bf16; shift: (cout, 1) f32;
    pw: (t_hw, R*Gw) bf16 (resident width-pool op); ph: (num_j, R*Gw, Gh*Gw)
    f32 (per-tile row-pool op).  Returns x0 (N, cout, HWp) bf16 and
    pooled (N, cout, Gh*Gw) f32."""
    N, cin, HWp = x_pix.shape
    cout = wt.shape[0]
    cb = cout // n_cb
    rgw = pw.shape[1]
    num_j = HWp // t_hw

    est = 2 * (cin * t_hw * 2 + cb * t_hw * 2 + cb * ghgw * 4 + rgw * ghgw * 4
               + t_hw * rgw * 2 + cb * cin * 2 + cb * 4)
    vmem_limit = int(min(56 * 1024 * 1024, max(2 * est, 16 * 1024 * 1024)))

    x0, pooled = pl.pallas_call(
        _spp_bn_pool_kernel,
        out_shape=(jax.ShapeDtypeStruct((N, cout, HWp), jnp.bfloat16),
                   jax.ShapeDtypeStruct((N, cout, ghgw), jnp.float32)),
        grid_spec=pltpu.PrefetchScalarGridSpec(
            num_scalar_prefetch=0,
            grid=(N, n_cb, num_j),
            in_specs=[
                pl.BlockSpec((1, cin, t_hw), lambda n, c, j: (n, 0, j)),   # x
                pl.BlockSpec((cb, cin), lambda n, c, j: (c, 0)),           # W^T
                pl.BlockSpec((cb, 1), lambda n, c, j: (c, 0)),             # shift
                pl.BlockSpec((t_hw, rgw), lambda n, c, j: (0, 0)),         # pw (resident)
                pl.BlockSpec((1, rgw, ghgw), lambda n, c, j: (j, 0, 0)),   # ph (tiny)
            ],
            out_specs=[
                pl.BlockSpec((1, cb, t_hw), lambda n, c, j: (n, c, j)),    # x0
                pl.BlockSpec((1, cb, ghgw), lambda n, c, j: (n, c, 0)),    # pooled
            ],
        ),
        compiler_params=pltpu.CompilerParams(
            dimension_semantics=("parallel", "parallel", "arbitrary"),
            vmem_limit_bytes=vmem_limit),
    )(x_pix, wt, shift, pw, ph)
    return x0, pooled


def _fuse(x0, w0t, zc_flat, uh, uw, shift, *, t_hw, n_ob):
    """x0: (N, bt, HWp) bf16; w0t: (out, bt) bf16; zc_flat: (N, out, Gh*Gw) f32;
    uh: (num_j, Gh*Gw, R*Gw) f32; uw: (R*Gw, t_hw) bf16; shift: (out, 1) f32.
    Returns (N, out, HWp) f32."""
    N, bt, HWp = x0.shape
    out = w0t.shape[0]
    ob = out // n_ob
    ghgw = zc_flat.shape[2]
    rgw = uw.shape[0]
    num_j = HWp // t_hw

    est = 2 * (bt * t_hw * 2 + ob * t_hw * 4 + ob * ghgw * 4 + ghgw * rgw * 4
               + rgw * t_hw * 2 + ob * bt * 2 + ob * 4)
    vmem_limit = int(min(56 * 1024 * 1024, max(2 * est, 16 * 1024 * 1024)))

    return pl.pallas_call(
        _fuse_kernel,
        out_shape=jax.ShapeDtypeStruct((N, out, HWp), jnp.float32),
        grid_spec=pltpu.PrefetchScalarGridSpec(
            num_scalar_prefetch=0,
            grid=(N, n_ob, num_j),
            in_specs=[
                pl.BlockSpec((1, bt, t_hw), lambda n, o, j: (n, 0, j)),    # x0
                pl.BlockSpec((ob, bt), lambda n, o, j: (o, 0)),            # W0^T
                pl.BlockSpec((1, ob, ghgw), lambda n, o, j: (n, o, 0)),    # Z
                pl.BlockSpec((1, ghgw, rgw), lambda n, o, j: (j, 0, 0)),   # Uh (tiny)
                pl.BlockSpec((rgw, t_hw), lambda n, o, j: (0, 0)),         # Uw (resident)
                pl.BlockSpec((ob, 1), lambda n, o, j: (o, 0)),             # shift
            ],
            out_specs=pl.BlockSpec((1, ob, t_hw), lambda n, o, j: (n, o, j)),
        ),
        compiler_params=pltpu.CompilerParams(
            dimension_semantics=("parallel", "parallel", "parallel"),
            vmem_limit_bytes=vmem_limit),
    )(x0, w0t, zc_flat, uh, uw, shift)


# ---------------------------------------------------------------------------
# Static linear operators (adaptive avg-pool, bilinear upsample) — numpy
# ---------------------------------------------------------------------------
def adaptive_pool_matrix(in_size, out_size):
    # PyTorch adaptive_avg_pool bins: [floor(i*in/out), ceil((i+1)*in/out))
    m = np.zeros((out_size, in_size), dtype=np.float32)
    for i in range(out_size):
        start = (i * in_size) // out_size
        end = -(-((i + 1) * in_size) // out_size)
        m[i, start:end] = 1.0 / (end - start)
    return m


def bilinear_matrix(in_size, out_size):
    # F.interpolate(mode='bilinear', align_corners=False) as a linear operator.
    m = np.zeros((out_size, in_size), dtype=np.float32)
    scale = in_size / out_size
    for o in range(out_size):
        src = (o + 0.5) * scale - 0.5
        src = max(src, 0.0)
        i0 = min(int(np.floor(src)), in_size - 1)
        i1 = min(i0 + 1, in_size - 1)
        lam = src - i0
        m[o, i0] += 1.0 - lam
        m[o, i1] += lam
    return m


# ---------------------------------------------------------------------------
# Parameter init (eval-mode BN folded into the conv weight + shift)
# ---------------------------------------------------------------------------
def init_bnreluconv(key, cin, cout):
    kw, kg, kb, km, kv = jax.random.split(key, 5)
    w = jax.random.normal(kw, (cin, cout), jnp.float32) * (1.0 / math.sqrt(cin))
    gamma = 1.0 + 0.1 * jax.random.normal(kg, (cout,), jnp.float32)
    beta = 0.1 * jax.random.normal(kb, (cout,), jnp.float32)
    running_mean = 0.1 * jax.random.normal(km, (cout,), jnp.float32)
    running_var = jnp.abs(jax.random.normal(kv, (cout,), jnp.float32)) + 0.5
    eps = 1e-5
    scale = gamma / jnp.sqrt(running_var + eps)
    shift = beta - running_mean * scale
    # Fold the BN scale into the weight once (static transform):
    # relu(scale*(x@w)+shift) == relu(x@(w*scale)+shift).
    return {"w": w * scale[None, :], "shift": shift}


# ---------------------------------------------------------------------------
# SpatialPyramidPooling forward (square_grid=False, fixed_size=None, use_bn)
# ---------------------------------------------------------------------------
def spatial_pyramid_pooling(x_nchw, params, *, grids, num_levels, max_tile=None):
    N, cin, H, W = x_nchw.shape
    if max_tile is None:
        max_tile = _default_max_tile()

    # ---- row-aligned, lane-dense spatial tiling ---------------------------
    lane_rows = 128 // math.gcd(W, 128)          # min rows so rows*W % 128 == 0
    if lane_rows * W > max_tile:
        rows_per_tile = H                        # single tile == full array dim
    else:
        rows_per_tile = min((max_tile // (lane_rows * W)) * lane_rows,
                            _round_up(H, lane_rows))
    rows_per_tile = max(rows_per_tile, 1)
    Hp = _round_up(H, rows_per_tile)
    R = rows_per_tile
    t_hw = R * W
    HWp = Hp * W
    num_j = Hp // R
    ar = W / H

    # ---- per-level grids + factorized pooling / upsample operators --------
    gh_list, gw_list = [], []
    for i in range(num_levels):
        gh_list.append(grids[i])
        gw_list.append(max(1, round(ar * grids[i])))   # same Python round() as ref
    Gh, Gw = sum(gh_list), sum(gw_list)
    GhGw, RGw = Gh * Gw, R * Gw
    level_grid_sizes = list(zip(gh_list, gw_list))

    aw_cat = np.concatenate([adaptive_pool_matrix(W, g).T for g in gw_list], axis=1)  # (W, Gw)
    bw_cat = np.concatenate([bilinear_matrix(g, W) for g in gw_list], axis=1)         # (W, Gw)
    ah_cat = np.zeros((Gh, Hp), np.float32)            # zero cols for padded rows
    bh_cat = np.zeros((Hp, Gh), np.float32)            # zero rows for padded rows
    off = 0
    for gh in gh_list:
        ah_cat[off:off + gh, :H] = adaptive_pool_matrix(H, gh)
        bh_cat[:H, off:off + gh] = bilinear_matrix(gh, H)
        off += gh

    eye_r = np.eye(R, dtype=np.float32)
    eye_gw = np.eye(Gw, dtype=np.float32)
    pw = np.kron(eye_r, aw_cat)                        # (t_hw, R*Gw)   resident
    uw = np.kron(eye_r, bw_cat.T)                      # (R*Gw, t_hw)   resident
    ph = np.stack([np.kron(ah_cat[:, j * R:(j + 1) * R].T, eye_gw)     # (R*Gw, Gh*Gw)
                   for j in range(num_j)], axis=0)
    uh = np.stack([np.kron(bh_cat[j * R:(j + 1) * R, :].T, eye_gw)     # (Gh*Gw, R*Gw)
                   for j in range(num_j)], axis=0)
    pw = jnp.asarray(pw, jnp.bfloat16)
    uw = jnp.asarray(uw, jnp.bfloat16)
    ph = jnp.asarray(ph, jnp.float32)
    uh = jnp.asarray(uh, jnp.float32)

    # ---- spp_bn (1x1 conv + folded BN + ReLU) with fused adaptive pooling --
    x_pix = jnp.pad(x_nchw.reshape(N, cin, H * W),
                    ((0, 0), (0, 0), (0, HWp - H * W))).astype(jnp.bfloat16)
    p_bn = params["spp_bn"]
    bt = p_bn["w"].shape[1]
    wt_bn = p_bn["w"].T.astype(jnp.bfloat16)                   # (bt, cin)
    sh_bn = p_bn["shift"].reshape(-1, 1).astype(jnp.float32)   # (bt, 1)
    n_cb = _pick_channel_blocks(N, bt)
    x0, pooled = _spp_bn_pool(x_pix, wt_bn, sh_bn, pw, ph,
                              t_hw=t_hw, n_cb=n_cb, ghgw=GhGw)

    # ---- tiny pyramid-level convs (<= sum gh*gw pixels each) in plain XLA,
    #      pre-contracted with the fuse weights into a block-diagonal Z so
    #      neither the upsample nor the channel concat ever hit HBM. --------
    w_fuse = params["spp_fuse"]["w"]                           # (final, out)
    out_size = w_fuse.shape[1]
    pooled4 = pooled.reshape(N, bt, Gh, Gw)
    zc = jnp.zeros((N, out_size, Gh, Gw), jnp.float32)
    gh_off = gw_off = 0
    ch_off = bt
    for i, (gh, gw) in enumerate(level_grid_sizes):
        p_lvl = params["levels"][i]
        lvl_in = pooled4[:, :, gh_off:gh_off + gh, gw_off:gw_off + gw]
        lvl = jnp.einsum("kc,nkhw->nchw", p_lvl["w"], lvl_in)
        lvl = jnp.maximum(lvl + p_lvl["shift"][None, :, None, None], 0.0)
        lsz = p_lvl["w"].shape[1]
        w_f_i = w_fuse[ch_off:ch_off + lsz]                    # (lvl, out)
        zc = zc.at[:, :, gh_off:gh_off + gh, gw_off:gw_off + gw].add(
            jnp.einsum("lo,nlhw->nohw", w_f_i, lvl))
        gh_off += gh
        gw_off += gw
        ch_off += lsz
    zc_flat = zc.reshape(N, out_size, GhGw)

    # ---- spp_fuse ----------------------------------------------------------
    w0t = w_fuse[:bt].T.astype(jnp.bfloat16)                   # (out, bt)
    sh_fuse = params["spp_fuse"]["shift"].reshape(-1, 1).astype(jnp.float32)
    n_ob = _pick_channel_blocks(N, out_size)
    out = _fuse(x0, w0t, zc_flat, uh, uw, sh_fuse, t_hw=t_hw, n_ob=n_ob)
    return out[:, :, :H * W].reshape(N, out_size, H, W)


# ---------------------------------------------------------------------------
# Pure-JAX f32 dense reference (independent of the factorized kernel path)
# ---------------------------------------------------------------------------
def spp_reference(x, params, *, grids, num_levels):
    N, cin, H, W = x.shape
    ar = W / H

    def bnrc(p, t):
        y = jnp.einsum("co,nchw->nohw", p["w"], t)
        return jnp.maximum(y + p["shift"][None, :, None, None], 0.0)

    x0 = bnrc(params["spp_bn"], x)
    levels = [x0]
    for i in range(num_levels):
        gh = grids[i]
        gw = max(1, round(ar * grids[i]))
        ah = jnp.asarray(adaptive_pool_matrix(H, gh))
        aw = jnp.asarray(adaptive_pool_matrix(W, gw))
        pooled = jnp.einsum("gh,nchw,kw->ncgk", ah, x0, aw)
        lvl = bnrc(params["levels"][i], pooled)
        bh = jnp.asarray(bilinear_matrix(gh, H))
        bw = jnp.asarray(bilinear_matrix(gw, W))
        levels.append(jnp.einsum("Hg,ncgk,Wk->ncHW", bh, lvl, bw))
    return bnrc(params["spp_fuse"], jnp.concatenate(levels, axis=1))


# ---------------------------------------------------------------------------
if __name__ == "__main__":
    # Small synthetic config (module defaults scaled down).
    num_maps_in = 4
    num_levels = 3
    bt_size = 32
    level_size = 16
    out_size = 16
    grids = (6, 3, 2, 1)
    N, H, W = 2, 16, 16

    key = jax.random.PRNGKey(0)
    kx, kp = jax.random.split(key)
    x = jax.random.normal(kx, (N, num_maps_in, H, W), jnp.float32)

    keys = jax.random.split(kp, num_levels + 2)
    params = {
        "spp_bn": init_bnreluconv(keys[0], num_maps_in, bt_size),
        "levels": [init_bnreluconv(keys[1 + i], bt_size, level_size)
                   for i in range(num_levels)],
        "spp_fuse": init_bnreluconv(
            keys[-1], bt_size + num_levels * level_size, out_size),
    }

    fwd = jax.jit(functools.partial(
        spatial_pyramid_pooling, grids=grids, num_levels=num_levels))

    out = jax.block_until_ready(fwd(x, params))
    assert out.shape == (N, out_size, H, W), out.shape
    assert bool(jnp.all(jnp.isfinite(out)))

    # Compare against the dense f32 reference (bf16-level tolerance).
    ref = spp_reference(x, params, grids=grids, num_levels=num_levels)
    tol = 1e-1 * (1.0 + float(jnp.max(jnp.abs(ref))))
    assert float(jnp.max(jnp.abs(out - ref))) <= tol

    # Also exercise the small-batch path (channel-split grid axis for v7x).
    out1 = jax.block_until_ready(fwd(x[:1], params))
    assert out1.shape == (1, out_size, H, W)
    assert float(jnp.max(jnp.abs(out1 - ref[:1]))) <= tol

    print("KERNEL_OK")
</pallas_src>

<mosaic_0001>
module attributes {stable_mosaic.version = 11 : i64} {
  func.func @_spp_bn_pool_kernel(%arg0: i32, %arg1: i32, %arg2: i32, %arg3: memref<1x4x256xbf16, #tpu.memory_space<vmem>>, %arg4: memref<32x4xbf16, #tpu.memory_space<vmem>>, %arg5: memref<32x1xf32, #tpu.memory_space<vmem>>, %arg6: memref<256x176xbf16, #tpu.memory_space<vmem>>, %arg7: memref<1x176x121xf32, #tpu.memory_space<vmem>>, %arg8: memref<1x32x256xbf16, #tpu.memory_space<vmem>>, %arg9: memref<1x32x121xf32, #tpu.memory_space<vmem>>) attributes {dimension_semantics = [#tpu.dimension_semantics<parallel>, #tpu.dimension_semantics<parallel>, #tpu.dimension_semantics<arbitrary>], iteration_bounds = array<i64: 2, 1, 1>, scalar_prefetch = 0 : i64, scratch_operands = 0 : i64, tpu.core_type = #tpu.core_type<tc>, window_params = [{transform_indices = @transform_0, window_bounds = array<i64: 1, 4, 256>}, {transform_indices = @transform_1, window_bounds = array<i64: 32, 4>}, {transform_indices = @transform_2, window_bounds = array<i64: 32, 1>}, {pipeline_mode = #tpu.pipeline_mode<synchronous>, transform_indices = @transform_3, window_bounds = array<i64: 256, 176>}, {transform_indices = @transform_4, window_bounds = array<i64: 1, 176, 121>}, {transform_indices = @transform_5, window_bounds = array<i64: 1, 32, 256>}, {transform_indices = @transform_6, window_bounds = array<i64: 1, 32, 121>}]} {
    %c0_i32 = arith.constant 0 : i32
    %0 = arith.cmpi eq, %arg2, %c0_i32 : i32
    %1 = arith.extui %0 : i1 to i32
    %c0_i32_0 = arith.constant 0 : i32
    %2 = arith.cmpi ne, %1, %c0_i32_0 : i32
    scf.if %2 {
      %cst_24 = arith.constant 0.000000e+00 : f32
      %27 = vector.broadcast %cst_24 : f32 to vector<1x32x121xf32>
      %c0_25 = arith.constant 0 : index
      %c0_26 = arith.constant 0 : index
      %c0_27 = arith.constant 0 : index
      %28 = vector.load %arg9[%c0_25, %c0_26, %c0_27] : memref<1x32x121xf32, #tpu.memory_space<vmem>>, vector<1x32x121xf32>
      tpu.vector_store %arg9[%c0_25, %c0_26, %c0_27], %27 {strides = array<i32>} : memref<1x32x121xf32, #tpu.memory_space<vmem>>, vector<1x32x121xf32>,
    } else {
    }
    %c0 = arith.constant 0 : index
    %c0_1 = arith.constant 0 : index
    %3 = vector.load %arg4[%c0, %c0_1] : memref<32x4xbf16, #tpu.memory_space<vmem>>, vector<32x4xbf16>
    %c0_2 = arith.constant 0 : index
    %c0_3 = arith.constant 0 : index
    %c0_4 = arith.constant 0 : index
    %4 = vector.load %arg3[%c0_2, %c0_3, %c0_4] : memref<1x4x256xbf16, #tpu.memory_space<vmem>>, vector<1x4x256xbf16>
    %5 = vector.shape_cast %4 : vector<1x4x256xbf16> to vector<4x256xbf16>
    %cst = arith.constant dense<0.000000e+00> : vector<32x256xf32>
    %6 = tpu.matmul %3, %5, %cst {dimension_numbers = #tpu.dot_dimension_numbers<[1], [0], [0], [1], [0, 0, 1, 1], [], []>} : vector<32x4xbf16>, vector<4x256xbf16>, vector<32x256xf32> -> vector<32x256xf32>
    %c0_5 = arith.constant 0 : index
    %c0_6 = arith.constant 0 : index
    %7 = vector.load %arg5[%c0_5, %c0_6] : memref<32x1xf32, #tpu.memory_space<vmem>>, vector<32x1xf32>
    %8 = vector.broadcast %7 : vector<32x1xf32> to vector<32x256xf32>
    %9 = arith.addf %6, %8 : vector<32x256xf32>
    %cst_7 = arith.constant 0.000000e+00 : f32
    %10 = vector.broadcast %cst_7 : f32 to vector<32x256xf32>
    %11 = arith.maximumf %9, %10 : vector<32x256xf32>
    %12 = arith.truncf %11 : vector<32x256xf32> to vector<32x256xbf16>
    %c0_8 = arith.constant 0 : index
    %c0_9 = arith.constant 0 : index
    %c0_10 = arith.constant 0 : index
    %13 = vector.load %arg8[%c0_8, %c0_9, %c0_10] : memref<1x32x256xbf16, #tpu.memory_space<vmem>>, vector<1x32x256xbf16>
    %14 = vector.shape_cast %13 : vector<1x32x256xbf16> to vector<32x256xbf16>
    %15 = vector.shape_cast %12 : vector<32x256xbf16> to vector<1x32x256xbf16>
    tpu.vector_store %arg8[%c0_8, %c0_9, %c0_10], %15 {strides = array<i32>} : memref<1x32x256xbf16, #tpu.memory_space<vmem>>, vector<1x32x256xbf16>,
    %c0_11 = arith.constant 0 : index
    %c0_12 = arith.constant 0 : index
    %16 = vector.load %arg6[%c0_11, %c0_12] : memref<256x176xbf16, #tpu.memory_space<vmem>>, vector<256x176xbf16>
    %cst_13 = arith.constant dense<0.000000e+00> : vector<32x176xf32>
    %17 = tpu.matmul %12, %16, %cst_13 {dimension_numbers = #tpu.dot_dimension_numbers<[1], [0], [0], [1], [0, 0, 1, 1], [], []>} : vector<32x256xbf16>, vector<256x176xbf16>, vector<32x176xf32> -> vector<32x176xf32>
    %c0_14 = arith.constant 0 : index
    %c0_15 = arith.constant 0 : index
    %c0_16 = arith.constant 0 : index
    %18 = vector.load %arg9[%c0_14, %c0_15, %c0_16] : memref<1x32x121xf32, #tpu.memory_space<vmem>>, vector<1x32x121xf32>
    %19 = vector.shape_cast %18 : vector<1x32x121xf32> to vector<32x121xf32>
    %c0_17 = arith.constant 0 : index
    %c0_18 = arith.constant 0 : index
    %c0_19 = arith.constant 0 : index
    %20 = vector.load %arg7[%c0_17, %c0_18, %c0_19] : memref<1x176x121xf32, #tpu.memory_space<vmem>>, vector<1x176x121xf32>
    %21 = vector.shape_cast %20 : vector<1x176x121xf32> to vector<176x121xf32>
    %cst_20 = arith.constant dense<0.000000e+00> : vector<32x121xf32>
    %22 = tpu.matmul %17, %21, %cst_20 {dimension_numbers = #tpu.dot_dimension_numbers<[1], [0], [0], [1], [0, 0, 1, 1], [], []>} : vector<32x176xf32>, vector<176x121xf32>, vector<32x121xf32> -> vector<32x121xf32>
    %23 = arith.addf %19, %22 : vector<32x121xf32>
    %c0_21 = arith.constant 0 : index
    %c0_22 = arith.constant 0 : index
    %c0_23 = arith.constant 0 : index
    %24 = vector.load %arg9[%c0_21, %c0_22, %c0_23] : memref<1x32x121xf32, #tpu.memory_space<vmem>>, vector<1x32x121xf32>
    %25 = vector.shape_cast %24 : vector<1x32x121xf32> to vector<32x121xf32>
    %26 = vector.shape_cast %23 : vector<32x121xf32> to vector<1x32x121xf32>
    tpu.vector_store %arg9[%c0_21, %c0_22, %c0_23], %26 {strides = array<i32>} : memref<1x32x121xf32, #tpu.memory_space<vmem>>, vector<1x32x121xf32>,
    return
  }
  func.func @transform_0(%arg0: i32, %arg1: i32, %arg2: i32) -> (i32, i32, i32) {
    %c0_i32 = arith.constant 0 : i32
    %c0_i32_0 = arith.constant 0 : i32
    return %arg0, %c0_i32, %arg2 : i32, i32, i32
  }
  func.func @transform_1(%arg0: i32, %arg1: i32, %arg2: i32) -> (i32, i32) {
    %c0_i32 = arith.constant 0 : i32
    %c0_i32_0 = arith.constant 0 : i32
    return %arg1, %c0_i32 : i32, i32
  }
  func.func @transform_2(%arg0: i32, %arg1: i32, %arg2: i32) -> (i32, i32) {
    %c0_i32 = arith.constant 0 : i32
    %c0_i32_0 = arith.constant 0 : i32
    return %arg1, %c0_i32 : i32, i32
  }
  func.func @transform_3(%arg0: i32, %arg1: i32, %arg2: i32) -> (i32, i32) {
    %c0_i32 = arith.constant 0 : i32
    %c0_i32_0 = arith.constant 0 : i32
    %c0_i32_1 = arith.constant 0 : i32
    return %c0_i32, %c0_i32_0 : i32, i32
  }
  func.func @transform_4(%arg0: i32, %arg1: i32, %arg2: i32) -> (i32, i32, i32) {
    %c0_i32 = arith.constant 0 : i32
    %c0_i32_0 = arith.constant 0 : i32
    %c0_i32_1 = arith.constant 0 : i32
    return %arg2, %c0_i32, %c0_i32_0 : i32, i32, i32
  }
  func.func @transform_5(%arg0: i32, %arg1: i32, %arg2: i32) -> (i32, i32, i32) {
    %c0_i32 = arith.constant 0 : i32
    return %arg0, %arg1, %arg2 : i32, i32, i32
  }
  func.func @transform_6(%arg0: i32, %arg1: i32, %arg2: i32) -> (i32, i32, i32) {
    %c0_i32 = arith.constant 0 : i32
    %c0_i32_0 = arith.constant 0 : i32
    return %arg0, %arg1, %c0_i32 : i32, i32, i32
  }
}

module attributes {stable_mosaic.version = 11 : i64} {
  func.func @_fuse_kernel(%arg0: i32, %arg1: i32, %arg2: i32, %arg3: memref<1x32x256xbf16, #tpu.memory_space<vmem>>, %arg4: memref<16x32xbf16, #tpu.memory_space<vmem>>, %arg5: memref<1x16x121xf32, #tpu.memory_space<vmem>>, %arg6: memref<1x121x176xf32, #tpu.memory_space<vmem>>, %arg7: memref<176x256xbf16, #tpu.memory_space<vmem>>, %arg8: memref<16x1xf32, #tpu.memory_space<vmem>>, %arg9: memref<1x16x256xf32, #tpu.memory_space<vmem>>) attributes {dimension_semantics = [#tpu.dimension_semantics<parallel>, #tpu.dimension_semantics<parallel>, #tpu.dimension_semantics<parallel>], iteration_bounds = array<i64: 2, 1, 1>, scalar_prefetch = 0 : i64, scratch_operands = 0 : i64, tpu.core_type = #tpu.core_type<tc>, window_params = [{transform_indices = @transform_0, window_bounds = array<i64: 1, 32, 256>}, {transform_indices = @transform_1, window_bounds = array<i64: 16, 32>}, {transform_indices = @transform_2, window_bounds = array<i64: 1, 16, 121>}, {transform_indices = @transform_3, window_bounds = array<i64: 1, 121, 176>}, {pipeline_mode = #tpu.pipeline_mode<synchronous>, transform_indices = @transform_4, window_bounds = array<i64: 176, 256>}, {transform_indices = @transform_5, window_bounds = array<i64: 16, 1>}, {transform_indices = @transform_6, window_bounds = array<i64: 1, 16, 256>}]} {
    %c0 = arith.constant 0 : index
    %c0_0 = arith.constant 0 : index
    %0 = vector.load %arg4[%c0, %c0_0] : memref<16x32xbf16, #tpu.memory_space<vmem>>, vector<16x32xbf16>
    %c0_1 = arith.constant 0 : index
    %c0_2 = arith.constant 0 : index
    %c0_3 = arith.constant 0 : index
    %1 = vector.load %arg3[%c0_1, %c0_2, %c0_3] : memref<1x32x256xbf16, #tpu.memory_space<vmem>>, vector<1x32x256xbf16>
    %2 = vector.shape_cast %1 : vector<1x32x256xbf16> to vector<32x256xbf16>
    %cst = arith.constant dense<0.000000e+00> : vector<16x256xf32>
    %3 = tpu.matmul %0, %2, %cst {dimension_numbers = #tpu.dot_dimension_numbers<[1], [0], [0], [1], [0, 0, 1, 1], [], []>} : vector<16x32xbf16>, vector<32x256xbf16>, vector<16x256xf32> -> vector<16x256xf32>
    %c0_4 = arith.constant 0 : index
    %c0_5 = arith.constant 0 : index
    %c0_6 = arith.constant 0 : index
    %4 = vector.load %arg5[%c0_4, %c0_5, %c0_6] : memref<1x16x121xf32, #tpu.memory_space<vmem>>, vector<1x16x121xf32>
    %5 = vector.shape_cast %4 : vector<1x16x121xf32> to vector<16x121xf32>
    %c0_7 = arith.constant 0 : index
    %c0_8 = arith.constant 0 : index
    %c0_9 = arith.constant 0 : index
    %6 = vector.load %arg6[%c0_7, %c0_8, %c0_9] : memref<1x121x176xf32, #tpu.memory_space<vmem>>, vector<1x121x176xf32>
    %7 = vector.shape_cast %6 : vector<1x121x176xf32> to vector<121x176xf32>
    %cst_10 = arith.constant dense<0.000000e+00> : vector<16x176xf32>
    %8 = tpu.matmul %5, %7, %cst_10 {dimension_numbers = #tpu.dot_dimension_numbers<[1], [0], [0], [1], [0, 0, 1, 1], [], []>} : vector<16x121xf32>, vector<121x176xf32>, vector<16x176xf32> -> vector<16x176xf32>
    %9 = arith.truncf %8 : vector<16x176xf32> to vector<16x176xbf16>
    %c0_11 = arith.constant 0 : index
    %c0_12 = arith.constant 0 : index
    %10 = vector.load %arg7[%c0_11, %c0_12] : memref<176x256xbf16, #tpu.memory_space<vmem>>, vector<176x256xbf16>
    %cst_13 = arith.constant dense<0.000000e+00> : vector<16x256xf32>
    %11 = tpu.matmul %9, %10, %cst_13 {dimension_numbers = #tpu.dot_dimension_numbers<[1], [0], [0], [1], [0, 0, 1, 1], [], []>} : vector<16x176xbf16>, vector<176x256xbf16>, vector<16x256xf32> -> vector<16x256xf32>
    %12 = arith.addf %3, %11 : vector<16x256xf32>
    %c0_14 = arith.constant 0 : index
    %c0_15 = arith.constant 0 : index
    %13 = vector.load %arg8[%c0_14, %c0_15] : memref<16x1xf32, #tpu.memory_space<vmem>>, vector<16x1xf32>
    %14 = vector.broadcast %13 : vector<16x1xf32> to vector<16x256xf32>
    %15 = arith.addf %12, %14 : vector<16x256xf32>
    %cst_16 = arith.constant 0.000000e+00 : f32
    %16 = vector.broadcast %cst_16 : f32 to vector<16x256xf32>
    %17 = arith.maximumf %15, %16 : vector<16x256xf32>
    %c0_17 = arith.constant 0 : index
    %c0_18 = arith.constant 0 : index
    %c0_19 = arith.constant 0 : index
    %18 = vector.load %arg9[%c0_17, %c0_18, %c0_19] : memref<1x16x256xf32, #tpu.memory_space<vmem>>, vector<1x16x256xf32>
    %19 = vector.shape_cast %18 : vector<1x16x256xf32> to vector<16x256xf32>
    %20 = vector.shape_cast %17 : vector<16x256xf32> to vector<1x16x256xf32>
    tpu.vector_store %arg9[%c0_17, %c0_18, %c0_19], %20 {strides = array<i32>} : memref<1x16x256xf32, #tpu.memory_space<vmem>>, vector<1x16x256xf32>,
    return
  }
  func.func @transform_0(%arg0: i32, %arg1: i32, %arg2: i32) -> (i32, i32, i32) {
    %c0_i32 = arith.constant 0 : i32
    %c0_i32_0 = arith.constant 0 : i32
    return %arg0, %c0_i32, %arg2 : i32, i32, i32
  }
  func.func @transform_1(%arg0: i32, %arg1: i32, %arg2: i32) -> (i32, i32) {
    %c0_i32 = arith.constant 0 : i32
    %c0_i32_0 = arith.constant 0 : i32
    return %arg1, %c0_i32 : i32, i32
  }
  func.func @transform_2(%arg0: i32, %arg1: i32, %arg2: i32) -> (i32, i32, i32) {
    %c0_i32 = arith.constant 0 : i32
    %c0_i32_0 = arith.constant 0 : i32
    return %arg0, %arg1, %c0_i32 : i32, i32, i32
  }
  func.func @transform_3(%arg0: i32, %arg1: i32, %arg2: i32) -> (i32, i32, i32) {
    %c0_i32 = arith.constant 0 : i32
    %c0_i32_0 = arith.constant 0 : i32
    %c0_i32_1 = arith.constant 0 : i32
    return %arg2, %c0_i32, %c0_i32_0 : i32, i32, i32
  }
  func.func @transform_4(%arg0: i32, %arg1: i32, %arg2: i32) -> (i32, i32) {
    %c0_i32 = arith.constant 0 : i32
    %c0_i32_0 = arith.constant 0 : i32
    %c0_i32_1 = arith.constant 0 : i32
    return %c0_i32, %c0_i32_0 : i32, i32
  }
  func.func @transform_5(%arg0: i32, %arg1: i32, %arg2: i32) -> (i32, i32) {
    %c0_i32 = arith.constant 0 : i32
    %c0_i32_0 = arith.constant 0 : i32
    return %arg1, %c0_i32 : i32, i32
  }
  func.func @transform_6(%arg0: i32, %arg1: i32, %arg2: i32) -> (i32, i32, i32) {
    %c0_i32 = arith.constant 0 : i32
    return %arg0, %arg1, %arg2 : i32, i32, i32
  }
}

</mosaic_0001>

<llo_original>
// kernel: spatial_pyramid_pooling.2
$region0: #{spatial_pyramid_pooling.2}
  #allocation0 [shape = 'u32[]', space=smem, size = 0x4, offset = 0x4, fixed_abs, tag = 'smem constant byte address 0x4 - core index']
  #allocation1 [shape = 'u32[144,128]{1,0:T(1,128)}', space=vmem, size = 0x12000, scoped, tag = 'internal scratch']
  %s0 = inlined_call_operand.vmem [shape: bf16[2,4,256], index: 0, kind: input, shape index: {}]
  %s1 = inlined_call_operand.vmem [shape: bf16[32,4], index: 1, kind: input, shape index: {}]
  %s2 = inlined_call_operand.vmem [shape: f32[32,1], index: 2, kind: input, shape index: {}]
  %s3 = inlined_call_operand.vmem [shape: bf16[256,176], index: 3, kind: input, shape index: {}]
  %s4 = inlined_call_operand.vmem [shape: f32[1,176,121], index: 4, kind: input, shape index: {}]
  %s5 = inlined_call_operand.vmem [shape: bf16[2,32,256], index: 5, kind: output, shape index: {0}]
  %s6 = inlined_call_operand.vmem [shape: f32[2,32,121], index: 6, kind: output, shape index: {1}]
  %7 = xla_tuple %s5, %s6
  %s8 = sld [smem:[#allocation0]]
  $region65: #{spatial_pyramid_pooling.2} parent=0
    _
  %s10 = ssub.s32 1, %s8
  %s11 = scalar_select 0, %s10, %s8
  loop: start=0, step=1, limit=4
  $region2: #{spatial_pyramid_pooling.2} parent=0 // loop_pre_header
    _
  $region3: #{spatial_pyramid_pooling.2} parent=0 // loop_header
    %s13 = sphi 0, %s17
    %p14 = scmp.ge.s32.totalorder %s13, 4
    %s20 = sphi 0, %s39
    %s21 = sphi 0, %s35
    %s22 = sphi 0, %s31
    %s23 = sphi 0, %s20
    %s24 = sphi 0, %s21
    %s25 = sphi 0, %s22
    %s26 = sphi 0, %s23
    %s27 = sphi 0, %s24
    %s28 = sphi 0, %s25
    %s44 = sphi 0, %s46
    %s47 = sphi 0, %s44
    %s48 = sphi 0, %s47
    %s64 = sphi 0, %s48
    %s70 = sphi 0, %s72
    %s73 = sphi 0, %s70
    %s74 = sphi 0, %s73
    %s90 = sphi 0, %s74
    %s96 = sphi 0, %s98
    %s99 = sphi 0, %s96
    %s100 = sphi 0, %s99
    %s116 = sphi 0, %s100
    %s120 = sphi 0, %s120
    %s122 = sphi 0, %s120
    %s123 = sphi 0, %s122
    %s137 = sphi 0, %s123
    %s143 = sphi 0, %s145
    %s146 = sphi 0, %s143
    %s147 = sphi 0, %s146
    %s163 = sphi 0, %s147
    %s173 = sphi 0, %s175
    %s176 = sphi 0, %s173
    %s177 = sphi 0, %s176
    %s193 = sphi 0, %s177
    %s201 = sphi 0, %s203
    %s204 = sphi 0, %s201
    %s205 = sphi 0, %s204
    %s221 = sphi 0, %s205
  $region4: #{spatial_pyramid_pooling.2} parent=0 // loop_header_branch
    %16 = sbr.rel (%p14) target = $region8
  $region5: #{spatial_pyramid_pooling.2} parent=0 // loop_body
    %s18 = ssub.s32 %s13, 1
    %s19 = ssub.s32 %s13, 2
    %s29 = sadd.s32 1, %s22
    %p30 = scmp.ge.s32.totalorder %s29, 1
    %s31 = scalar_select %p30, 0, %s29
    %s32 = sadd.s32 1, %s21
    %s33 = scalar_select %p30, %s32, %s21
    %p34 = scmp.ge.s32.totalorder %s33, 1
    %s35 = scalar_select %p34, 0, %s33
    %s36 = sadd.s32 1, %s20
    %s37 = scalar_select %p34, %s36, %s20
    %p38 = scmp.ge.s32.totalorder %s37, 2
    %s39 = scalar_select %p38, 0, %s37
    %s40 = ssub.s32 %s20, %s39
    %s41 = ssub.s32 %s22, %s31
    %s42 = sor.u32 %s40, %s41
    %p43 = scmp.eq.s32.totalorder %s42, 0
    %s45 = sadd.s32 %s44, 1
    %s46 = scalar_select %p43, %s44, %s45
    %p49 = pneg %p43
    %p50 = scmp.eq.s32.totalorder %s13, 1
    %p51 = por %p49, %p50
    %p52 = scmp.ne.s32.totalorder %s44, %s47
    %p53 = scmp.eq.s32.totalorder %s13, 0
    %p54 = por %p52, %p53
    %p55 = scmp.ne.s32.totalorder %s44, %s47
    %p56 = scmp.eq.s32.totalorder %s18, 1
    %p57 = por %p55, %p56
    %p58 = scmp.ne.s32.totalorder %s47, %s48
    %p59 = scmp.eq.s32.totalorder %s18, 0
    %p60 = por %p58, %p59
    %p61 = scmp.ne.s32.totalorder %s47, %s48
    %p62 = scmp.eq.s32.totalorder %s19, 1
    %p63 = por %p61, %p62
    %p65 = scmp.ne.s32.totalorder %s48, %s64
    %p66 = scmp.eq.s32.totalorder %s19, 0
    %p67 = por %p65, %p66
    %s68 = ssub.s32 %s21, %s35
    %p69 = scmp.eq.s32.totalorder %s68, 0
    %s71 = sadd.s32 %s70, 1
    %s72 = scalar_select %p69, %s70, %s71
    %p75 = pneg %p69
    %p76 = scmp.eq.s32.totalorder %s13, 1
    %p77 = por %p75, %p76
    %p78 = scmp.ne.s32.totalorder %s70, %s73
    %p79 = scmp.eq.s32.totalorder %s13, 0
    %p80 = por %p78, %p79
    %p81 = scmp.ne.s32.totalorder %s70, %s73
    %p82 = scmp.eq.s32.totalorder %s18, 1
    %p83 = por %p81, %p82
    %p84 = scmp.ne.s32.totalorder %s73, %s74
    %p85 = scmp.eq.s32.totalorder %s18, 0
    %p86 = por %p84, %p85
    %p87 = scmp.ne.s32.totalorder %s73, %s74
    %p88 = scmp.eq.s32.totalorder %s19, 1
    %p89 = por %p87, %p88
    %p91 = scmp.ne.s32.totalorder %s74, %s90
    %p92 = scmp.eq.s32.totalorder %s19, 0
    %p93 = por %p91, %p92
    %s94 = ssub.s32 %s21, %s35
    %p95 = scmp.eq.s32.totalorder %s94, 0
    %s97 = sadd.s32 %s96, 1
    %s98 = scalar_select %p95, %s96, %s97
    %p101 = pneg %p95
    %p102 = scmp.eq.s32.totalorder %s13, 1
    %p103 = por %p101, %p102
    %p104 = scmp.ne.s32.totalorder %s96, %s99
    %p105 = scmp.eq.s32.totalorder %s13, 0
    %p106 = por %p104, %p105
    %p107 = scmp.ne.s32.totalorder %s96, %s99
    %p108 = scmp.eq.s32.totalorder %s18, 1
    %p109 = por %p107, %p108
    %p110 = scmp.ne.s32.totalorder %s99, %s100
    %p111 = scmp.eq.s32.totalorder %s18, 0
    %p112 = por %p110, %p111
    %p113 = scmp.ne.s32.totalorder %s99, %s100
    %p114 = scmp.eq.s32.totalorder %s19, 1
    %p115 = por %p113, %p114
    %p117 = scmp.ne.s32.totalorder %s100, %s116
    %p118 = scmp.eq.s32.totalorder %s19, 0
    %p119 = por %p117, %p118
    %s121 = sadd.s32 %s120, 1
    %p124 = scmp.eq.s32.totalorder %s13, 1
    %p125 = scmp.ne.s32.totalorder %s120, %s122
    %p126 = scmp.eq.s32.totalorder %s13, 0
    %p127 = por %p125, %p126
    %p128 = scmp.ne.s32.totalorder %s120, %s122
    %p129 = scmp.eq.s32.totalorder %s18, 1
    %p130 = por %p128, %p129
    %p131 = scmp.ne.s32.totalorder %s122, %s123
    %p132 = scmp.eq.s32.totalorder %s18, 0
    %p133 = por %p131, %p132
    %p134 = scmp.ne.s32.totalorder %s122, %s123
    %p135 = scmp.eq.s32.totalorder %s19, 1
    %p136 = por %p134, %p135
    %p138 = scmp.ne.s32.totalorder %s123, %s137
    %p139 = scmp.eq.s32.totalorder %s19, 0
    %p140 = por %p138, %p139
    %s141 = ssub.s32 %s22, %s31
    %p142 = scmp.eq.s32.totalorder %s141, 0
    %s144 = sadd.s32 %s143, 1
    %s145 = scalar_select %p142, %s143, %s144
    %p148 = pneg %p142
    %p149 = scmp.eq.s32.totalorder %s13, 1
    %p150 = por %p148, %p149
    %p151 = scmp.ne.s32.totalorder %s143, %s146
    %p152 = scmp.eq.s32.totalorder %s13, 0
    %p153 = por %p151, %p152
    %p154 = scmp.ne.s32.totalorder %s143, %s146
    %p155 = scmp.eq.s32.totalorder %s18, 1
    %p156 = por %p154, %p155
    %p157 = scmp.ne.s32.totalorder %s146, %s147
    %p158 = scmp.eq.s32.totalorder %s18, 0
    %p159 = por %p157, %p158
    %p160 = scmp.ne.s32.totalorder %s146, %s147
    %p161 = scmp.eq.s32.totalorder %s19, 1
    %p162 = por %p160, %p161
    %p164 = scmp.ne.s32.totalorder %s147, %s163
    %p165 = scmp.eq.s32.totalorder %s19, 0
    %p166 = por %p164, %p165
    %s167 = ssub.s32 %s20, %s39
    %s168 = ssub.s32 %s21, %s35
    %s169 = sor.u32 %s167, %s168
    %s170 = ssub.s32 %s22, %s31
    %s171 = sor.u32 %s169, %s170
    %p172 = scmp.eq.s32.totalorder %s171, 0
    %s174 = sadd.s32 %s173, 1
    %s175 = scalar_select %p172, %s173, %s174
    %p178 = pneg %p172
    %p179 = scmp.eq.s32.totalorder %s13, 1
    %p180 = por %p178, %p179
    %p181 = scmp.ne.s32.totalorder %s173, %s176
    %p182 = scmp.eq.s32.totalorder %s13, 0
    %p183 = por %p181, %p182
    %p184 = scmp.ne.s32.totalorder %s173, %s176
    %p185 = scmp.eq.s32.totalorder %s18, 1
    %p186 = por %p184, %p185
    %p187 = scmp.ne.s32.totalorder %s176, %s177
    %p188 = scmp.eq.s32.totalorder %s18, 0
    %p189 = por %p187, %p188
    %p190 = scmp.ne.s32.totalorder %s176, %s177
    %p191 = scmp.eq.s32.totalorder %s19, 1
    %p192 = por %p190, %p191
    %p194 = scmp.ne.s32.totalorder %s177, %s193
    %p195 = scmp.eq.s32.totalorder %s19, 0
    %p196 = por %p194, %p195
    %s197 = ssub.s32 %s20, %s39
    %s198 = ssub.s32 %s21, %s35
    %s199 = sor.u32 %s197, %s198
    %p200 = scmp.eq.s32.totalorder %s199, 0
    %s202 = sadd.s32 %s201, 1
    %s203 = scalar_select %p200, %s201, %s202
    %p206 = pneg %p200
    %p207 = scmp.eq.s32.totalorder %s13, 1
    %p208 = por %p206, %p207
    %p209 = scmp.ne.s32.totalorder %s201, %s204
    %p210 = scmp.eq.s32.totalorder %s13, 0
    %p211 = por %p209, %p210
    %p212 = scmp.ne.s32.totalorder %s201, %s204
    %p213 = scmp.eq.s32.totalorder %s18, 1
    %p214 = por %p212, %p213
    %p215 = scmp.ne.s32.totalorder %s204, %s205
    %p216 = scmp.eq.s32.totalorder %s18, 0
    %p217 = por %p215, %p216
    %p218 = scmp.ne.s32.totalorder %s204, %s205
    %p219 = scmp.eq.s32.totalorder %s19, 1
    %p220 = por %p218, %p219
    %p222 = scmp.ne.s32.totalorder %s205, %s221
    %p223 = scmp.eq.s32.totalorder %s19, 0
    %p224 = por %p222, %p223
    %p225 = scmp.le.s32.totalorder 1, %s13
    %p226 = scmp.lt.s32.totalorder %s13, 3
    %p227 = pnand %p225, %p226
    %p228 = pneg %p227
    // Predicated region
    $region9: #{spatial_pyramid_pooling.2} parent=5 // pred_check
      _
    $region10: #{spatial_pyramid_pooling.2} parent=5 // pred_check_branch
      %230 = sbr.rel (%p227) target = $region12
    $region11: #{spatial_pyramid_pooling.2} parent=5 // pred_region
      %s231 = ssub.s32 %s13, 1
      // Predicated region
      $region13: #{spatial_pyramid_pooling.2} parent=11 // pred_check
        %p232 = pneg %p86
      $region14: #{spatial_pyramid_pooling.2} parent=11 // pred_check_branch
        %234 = sbr.rel (%p232) target = $region16
      $region15: #{spatial_pyramid_pooling.2} parent=11 // pred_region
        %s235 = smul.u32 4, %s24
        %p236 = scmp.lt.s32.totalorder %s235, 3
        %s237 = scalar_select %p236, %s235, 3
        %s238 = smul.addr %s237, 4
        %s239 = scalar_lea.vmem %s1, %s238
        %s240 = smul.u32 4, %s24
      $region16: #{spatial_pyramid_pooling.2} parent=11 // pred_fallthru
        _
      // Predicated region
      $region17: #{spatial_pyramid_pooling.2} parent=11 // pred_check
        %p241 = pneg %p112
      $region18: #{spatial_pyramid_pooling.2} parent=11 // pred_check_branch
        %243 = sbr.rel (%p241) target = $region20
      $region19: #{spatial_pyramid_pooling.2} parent=11 // pred_region
        %s244 = smul.u32 4, %s24
        %p245 = scmp.lt.s32.totalorder %s244, 3
        %s246 = scalar_select %p245, %s244, 3
        %s247 = smul.addr %s246, 8
        %s248 = scalar_lea.vmem %s2, %s247
        %s249 = smul.u32 4, %s24
      $region20: #{spatial_pyramid_pooling.2} parent=11 // pred_fallthru
        _
      // Predicated region
      $region21: #{spatial_pyramid_pooling.2} parent=11 // pred_check
        %p250 = pneg %p133
      $region22: #{spatial_pyramid_pooling.2} parent=11 // pred_check_branch
        %252 = sbr.rel (%p250) target = $region24
      $region23: #{spatial_pyramid_pooling.2} parent=11 // pred_region
        _
      $region24: #{spatial_pyramid_pooling.2} parent=11 // pred_fallthru
        _
      // Predicated region
      $region25: #{spatial_pyramid_pooling.2} parent=11 // pred_check
        %p253 = pneg %p159
      $region26: #{spatial_pyramid_pooling.2} parent=11 // pred_check_branch
        %255 = sbr.rel (%p253) target = $region28
      $region27: #{spatial_pyramid_pooling.2} parent=11 // pred_region
        %p256 = scmp.lt.s32.totalorder %s25, 0
        %s257 = scalar_select %p256, %s25, 0
        %s258 = smul.addr %s257, 22
        %s259 = smul.addr %s258, 8
        %s260 = scalar_lea.vmem %s4, %s259
      $region28: #{spatial_pyramid_pooling.2} parent=11 // pred_fallthru
        _
    $region12: #{spatial_pyramid_pooling.2} parent=5 // pred_fallthru
      _
    %p261 = scmp.lt.s32.totalorder %s13, 2
    // Predicated region
    $region29: #{spatial_pyramid_pooling.2} parent=5 // pred_check
      %p262 = pneg %p261
    $region30: #{spatial_pyramid_pooling.2} parent=5 // pred_check_branch
      %264 = sbr.rel (%p262) target = $region32
    $region31: #{spatial_pyramid_pooling.2} parent=5 // pred_region
      // Predicated region
      $region33: #{spatial_pyramid_pooling.2} parent=31 // pred_check
        %p265 = pneg %p54
      $region34: #{spatial_pyramid_pooling.2} parent=31 // pred_check_branch
        %267 = sbr.rel (%p265) target = $region36
      $region35: #{spatial_pyramid_pooling.2} parent=31 // pred_region
        %s268 = smul.u32 2, %s22
        %p269 = scmp.lt.s32.totalorder %s20, 1
        %s270 = scalar_select %p269, %s20, 1
        %p271 = scmp.lt.s32.totalorder %s268, 1
        %s272 = scalar_select %p271, %s268, 1
        %s273 = smul.addr %s270, 2
        %s274 = sadd.s32 %s272, %s273
        %s275 = smul.addr %s274, 2
        %s276 = scalar_lea.vmem %s0, %s275
        %s277 = smul.u32 2, %s22
      $region36: #{spatial_pyramid_pooling.2} parent=31 // pred_fallthru
        _
    $region32: #{spatial_pyramid_pooling.2} parent=5 // pred_fallthru
      _
    %p278 = scmp.le.s32.totalorder 1, %s13
    %p279 = scmp.lt.s32.totalorder %s13, 3
    %p280 = pnand %p278, %p279
    %p281 = pneg %p280
    // Predicated region
    $region37: #{spatial_pyramid_pooling.2} parent=5 // pred_check
      _
    $region38: #{spatial_pyramid_pooling.2} parent=5 // pred_check_branch
      %283 = sbr.rel (%p280) target = $region40
    $region39: #{spatial_pyramid_pooling.2} parent=5 // pred_region
      %s284 = ssub.s32 %s13, 1
      %s285 = smul.u32 2, %s25
      %p286 = scmp.lt.s32.totalorder %s23, 1
      %s287 = scalar_select %p286, %s23, 1
      %p288 = scmp.lt.s32.totalorder %s285, 1
      %s289 = scalar_select %p288, %s285, 1
      %s290 = smul.addr %s287, 2
      %s291 = sadd.s32 %s289, %s290
      %s292 = smul.addr %s291, 2
      %s293 = scalar_lea.vmem %s0, %s292
      %p294 = pneg %p60
      %p295 = pneg %p57
      %s296 = smul.u32 4, %s24
      %p297 = scmp.lt.s32.totalorder %s296, 3
      %s298 = scalar_select %p297, %s296, 3
      %s299 = smul.addr %s298, 4
      %s300 = scalar_lea.vmem %s1, %s299
      %p301 = pneg %p86
      %p302 = pneg %p83
      %s303 = smul.u32 4, %s24
      %p304 = scmp.lt.s32.totalorder %s303, 3
      %s305 = scalar_select %p304, %s303, 3
      %s306 = smul.addr %s305, 8
      %s307 = scalar_lea.vmem %s2, %s306
      %p308 = pneg %p112
      %p309 = pneg %p109
      %p310 = pneg %p133
      %p311 = pneg %p130
      %p312 = scmp.lt.s32.totalorder %s25, 0
      %s313 = scalar_select %p312, %s25, 0
      %s314 = smul.addr %s313, 22
      %s315 = smul.addr %s314, 8
      %s316 = scalar_lea.vmem %s4, %s315
      %p317 = pneg %p159
      %p318 = pneg %p156
      %p319 = pneg %p189
      %p320 = pneg %p186
      %s321 = smul.u32 4, %s24
      %s322 = smul.u32 2, %s25
      %p323 = scmp.lt.s32.totalorder %s23, 1
      %s324 = scalar_select %p323, %s23, 1
      %p325 = scmp.lt.s32.totalorder %s321, 3
      %s326 = scalar_select %p325, %s321, 3
      %p327 = scmp.lt.s32.totalorder %s322, 1
      %s328 = scalar_select %p327, %s322, 1
      %s329 = smul.addr %s326, 2
      %s330 = sadd.s32 %s328, %s329
      %s331 = smul.addr %s324, 8
      %s332 = sadd.s32 %s330, %s331
      %s333 = smul.addr %s332, 4
      %s334 = scalar_lea.vmem %s5, %s333
      %p335 = pneg %p217
      %p336 = pneg %p214
      %s337 = smul.u32 4, %s24
      %p338 = scmp.lt.s32.totalorder %s23, 1
      %s339 = scalar_select %p338, %s23, 1
      %p340 = scmp.lt.s32.totalorder %s337, 3
      %s341 = scalar_select %p340, %s337, 3
      %s342 = smul.addr %s339, 4
      %s343 = sadd.s32 %s341, %s342
      %s344 = smul.addr %s343, 8
      %s345 = scalar_lea.vmem %s6, %s344
      %s346 = smul.u32 2, %s25
      %p347 = scmp.lt.s32.totalorder %s23, 1
      %s348 = scalar_select %p347, %s23, 1
      %p349 = scmp.lt.s32.totalorder %s346, 1
      %s350 = scalar_select %p349, %s346, 1
      %s351 = smul.addr %s348, 2
      %s352 = sadd.s32 %s350, %s351
      %s353 = smul.addr %s352, 2
      %s354 = scalar_lea.vmem %s0, %s353
      %s355 = smul.u32 2, %s25
      %s356 = smul.u32 4, %s24
      %p357 = scmp.lt.s32.totalorder %s356, 3
      %s358 = scalar_select %p357, %s356, 3
      %s359 = smul.addr %s358, 4
      %s360 = scalar_lea.vmem %s1, %s359
      %s361 = smul.u32 4, %s24
      %s362 = smul.u32 4, %s24
      %p363 = scmp.lt.s32.totalorder %s362, 3
      %s364 = scalar_select %p363, %s362, 3
      %s365 = smul.addr %s364, 8
      %s366 = scalar_lea.vmem %s2, %s365
      %s367 = smul.u32 4, %s24
      %p368 = scmp.lt.s32.totalorder %s25, 0
      %s369 = scalar_select %p368, %s25, 0
      %s370 = smul.addr %s369, 22
      %s371 = smul.addr %s370, 8
      %s372 = scalar_lea.vmem %s4, %s371
      %s373 = smul.u32 4, %s24
      %s374 = smul.u32 2, %s25
      %p375 = scmp.lt.s32.totalorder %s23, 1
      %s376 = scalar_select %p375, %s23, 1
      %p377 = scmp.lt.s32.totalorder %s373, 3
      %s378 = scalar_select %p377, %s373, 3
      %p379 = scmp.lt.s32.totalorder %s374, 1
      %s380 = scalar_select %p379, %s374, 1
      %s381 = smul.addr %s378, 2
      %s382 = sadd.s32 %s380, %s381
      %s383 = smul.addr %s376, 8
      %s384 = sadd.s32 %s382, %s383
      %s385 = smul.addr %s384, 4
      %s386 = scalar_lea.vmem %s5, %s385
      %s387 = smul.u32 4, %s24
      %s388 = smul.u32 2, %s25
      %s389 = smul.u32 4, %s24
      %p390 = scmp.lt.s32.totalorder %s23, 1
      %s391 = scalar_select %p390, %s23, 1
      %p392 = scmp.lt.s32.totalorder %s389, 3
      %s393 = scalar_select %p392, %s389, 3
      %s394 = smul.addr %s391, 4
      %s395 = sadd.s32 %s393, %s394
      %s396 = smul.addr %s395, 8
      %s397 = scalar_lea.vmem %s6, %s396
      %s398 = smul.u32 4, %s24
      %p400 = scmp.eq.s32.totalorder %s25, 0
      // Predicated region
      $region41: #{spatial_pyramid_pooling.2} parent=39 // pred_check
        %p401 = pneg %p400
      $region42: #{spatial_pyramid_pooling.2} parent=39 // pred_check_branch
        %403 = sbr.rel (%p401) target = $region44
      $region43: #{spatial_pyramid_pooling.2} parent=39 // pred_region
        %vm404 = vcmask 990208
        %405 = vst.msk [vmem:[%s397] sm:$0xff] %vm404, 0.0
        %406 = vst.msk [vmem:[%s397 + $0x8] sm:$0xff] %vm404, 0.0
        %407 = vst.msk [vmem:[%s397 + $0x10] sm:$0xff] %vm404, 0.0
        %408 = vst.msk [vmem:[%s397 + $0x18] sm:$0xff] %vm404, 0.0
      $region44: #{spatial_pyramid_pooling.2} parent=39 // pred_fallthru
        _
      %v409 = vld [vmem:[%s360] sm:$0xf]
      %v410 = vld [vmem:[%s360 + $0x4] sm:$0xf]
      %v411 = vld [vmem:[%s360 + $0x8] sm:$0xf]
      %v412 = vld [vmem:[%s360 + $0xc] sm:$0xf]
      %v413 = vld [vmem:[%s354] sm:$0xf]
      %v414 = vld [vmem:[%s366] sm:$0xff]
      %v415 = vld [vmem:[%s366 + $0x8] sm:$0xff]
      %v416 = vld [vmem:[%s366 + $0x10] sm:$0xff]
      %v417 = vld [vmem:[%s366 + $0x18] sm:$0xff]
      %419 = vset.pattern.permute.xlu0 0
      %420 = vperm.xlu0 %419, %v414
      %v421 = vpop.permute.xlu0 %420
      %424 = vset.pattern.permute.xlu0 0
      %425 = vperm.xlu0 %424, %v415
      %v426 = vpop.permute.xlu0 %425
      %429 = vset.pattern.permute.xlu0 0
      %430 = vperm.xlu0 %429, %v416
      %v431 = vpop.permute.xlu0 %430
      %434 = vset.pattern.permute.xlu0 0
      %435 = vperm.xlu0 %434, %v417
      %v436 = vpop.permute.xlu0 %435
      %v442 = vunpack.c.l.b16 %v409
      %v443 = vunpack.c.l.b16 %v410
      %v444 = vunpack.c.l.b16 %v411
      %v445 = vunpack.c.l.b16 %v412
      %v446 = vpack.c.b16 %v443, %v442
      %v447 = vpack.c.b16 %v445, %v444
      %v450 = vunpack.c.l.s4 1983009808
      %v451 = vunpack.c.0.s8 %v450
      %v452 = vlaneseq
      %v453 = vshrl.u32 %v452, 7
      %v454 = vsub.s32 %v451, %v453
      %v455 = vrot.slane %v413, %v454
      %v456 = vcombine.high %v455, %v455
      %vm457 = vcmask 31744
      %v459 = vsel %vm457, %v446, 0
      %v462 = vsel %vm457, %v447, 0
      %vm464 = vcmask 1041408
      %v466 = vsel %vm464, %v455, 0
      %v469 = vsel %vm464, %v456, 0
      %471 = vmatprep.subr.bf16.mxu0 %v469
      %472 = vmatpush1.bf16.msra.mxu0 %v466
      %473 = vmatprep.subr.bf16.mxu0 0
      %474 = vmatpush1.bf16.msra.mxu0 0
      %475 = vmatprep.subr.bf16.mxu0 0
      %476 = vmatpush1.bf16.msra.mxu0 0
      %477 = vmatprep.subr.bf16.mxu0 0
      %478 = vmatpush1.bf16.msra.mxu0 0
      %479 = vmatprep.subr.bf16.mxu0 0
      %480 = vmatpush1.bf16.msra.mxu0 0
      %481 = vmatprep.subr.bf16.mxu0 0
      %482 = vmatpush1.bf16.msra.mxu0 0
      %483 = vmatprep.subr.bf16.mxu0 0
      %484 = vmatpush1.bf16.msra.mxu0 0
      %485 = vmatprep.subr.bf16.mxu0 0
      %486 = vmatpush1.bf16.msra.mxu0 0
      %487 = vmatprep.subr.bf16.mxu0 0
      %488 = vmatpush1.bf16.msra.mxu0 0
      %489 = vmatprep.subr.bf16.mxu0 0
      %490 = vmatpush1.bf16.msra.mxu0 0
      %491 = vmatprep.subr.bf16.mxu0 0
      %492 = vmatpush1.bf16.msra.mxu0 0
      %493 = vmatprep.subr.bf16.mxu0 0
      %494 = vmatpush1.bf16.msra.mxu0 0
      %495 = vmatprep.subr.bf16.mxu0 0
      %496 = vmatpush1.bf16.msra.mxu0 0
      %497 = vmatprep.subr.bf16.mxu0 0
      %498 = vmatpush1.bf16.msra.mxu0 0
      %499 = vmatprep.subr.bf16.mxu0 0
      %500 = vmatpush1.bf16.msra.mxu0 0
      %501 = vmatprep.subr.bf16.mxu0 0
      %502 = vmatpush1.bf16.msra.mxu0 0
      %503 = vmatprep.mubr.bf16.mxu0 0
      %504 = vmatmul.mubr.bf16.gmra.mrb[0].mxu0 %v459
      %v505 = vpop.f32.mrb[0].mxu0
      %v506 = vadd.f32 %v421, %v505
      %v507 = vpop.f32.mrb[0].mxu0
      %v508 = vadd.f32 %v421, %v507
      %v509 = vpop.f32.mrb[0].mxu0
      %v510 = vadd.f32 %v426, %v509
      %v511 = vpop.f32.mrb[0].mxu0
      %v512 = vadd.f32 %v426, %v511
      %513 = vmatprep.mubr.bf16.mxu0 0
      %514 = vmatmul.mubr.bf16.gmra.mrb[0].mxu0 %v462
      %v515 = vpop.f32.mrb[0].mxu0
      %v516 = vadd.f32 %v431, %v515
      %v517 = vpop.f32.mrb[0].mxu0
      %v518 = vadd.f32 %v431, %v517
      %v519 = vpop.f32.mrb[0].mxu0
      %v520 = vadd.f32 %v436, %v519
      %v521 = vpop.f32.mrb[0].mxu0
      %v522 = vadd.f32 %v436, %v521
      %523 = vdwg.mxu0
      %v524 = vmax.f32 %v506, 0.0
      %v525 = vmax.f32 %v508, 0.0
      %v526 = vmax.f32 %v510, 0.0
      %v527 = vmax.f32 %v512, 0.0
      %v528 = vmax.f32 %v516, 0.0
      %v529 = vmax.f32 %v518, 0.0
      %v530 = vmax.f32 %v520, 0.0
      %v531 = vmax.f32 %v522, 0.0
      %v532 = vpack.c.bf16 %v526, %v524
      %v533 = vpack.c.bf16 %v527, %v525
      %v534 = vpack.c.bf16 %v530, %v528
      %v535 = vpack.c.bf16 %v531, %v529
      %v540 = vunpack.c.l.b16 %v532
      %v541 = vunpack.c.l.b16 %v533
      %v542 = vunpack.c.h.b16 %v532
      %v543 = vunpack.c.h.b16 %v533
      %v544 = vunpack.c.l.b16 %v534
      %v545 = vunpack.c.l.b16 %v535
      %v546 = vunpack.c.h.b16 %v534
      %v547 = vunpack.c.h.b16 %v535
      %v548 = vpack.c.b16 %v541, %v540
      %v549 = vpack.c.b16 %v543, %v542
      %v550 = vpack.c.b16 %v545, %v544
      %v551 = vpack.c.b16 %v547, %v546
      %556 = vst [vmem:[%s386] sm:$0xff] %v548
      %557 = vst [vmem:[%s386 + $0x8] sm:$0xff] %v549
      %558 = vst [vmem:[%s386 + $0x10] sm:$0xff] %v550
      %559 = vst [vmem:[%s386 + $0x18] sm:$0xff] %v551
      %v560 = vld [vmem:[%s3] sm:$0xff]
      %v561 = vld [vmem:[%s3 + $0x8] sm:$0xff]
      %v562 = vld [vmem:[%s3 + $0x10] sm:$0xff]
      %v563 = vld [vmem:[%s3 + $0x18] sm:$0xff]
      %v564 = vld [vmem:[%s3 + $0x20] sm:$0xff]
      %v565 = vld [vmem:[%s3 + $0x28] sm:$0xff]
      %v566 = vld [vmem:[%s3 + $0x30] sm:$0xff]
      %v567 = vld [vmem:[%s3 + $0x38] sm:$0xff]
      %v568 = vld [vmem:[%s3 + $0x40] sm:$0xff]
      %v569 = vld [vmem:[%s3 + $0x48] sm:$0xff]
      %v570 = vld [vmem:[%s3 + $0x50] sm:$0xff]
      %v571 = vld [vmem:[%s3 + $0x58] sm:$0xff]
      %v572 = vld [vmem:[%s3 + $0x60] sm:$0xff]
      %v573 = vld [vmem:[%s3 + $0x68] sm:$0xff]
      %v574 = vld [vmem:[%s3 + $0x70] sm:$0xff]
      %v575 = vld [vmem:[%s3 + $0x78] sm:$0xff]
      %v576 = vld [vmem:[%s3 + $0x80] sm:$0xff]
      %v577 = vld [vmem:[%s3 + $0x88] sm:$0xff]
      %v578 = vld [vmem:[%s3 + $0x90] sm:$0xff]
      %v579 = vld [vmem:[%s3 + $0x98] sm:$0xff]
      %v580 = vld [vmem:[%s3 + $0xa0] sm:$0xff]
      %v581 = vld [vmem:[%s3 + $0xa8] sm:$0xff]
      %v582 = vld [vmem:[%s3 + $0xb0] sm:$0xff]
      %v583 = vld [vmem:[%s3 + $0xb8] sm:$0xff]
      %v584 = vld [vmem:[%s3 + $0xc0] sm:$0xff]
      %v585 = vld [vmem:[%s3 + $0xc8] sm:$0xff]
      %v586 = vld [vmem:[%s3 + $0xd0] sm:$0xff]
      %v587 = vld [vmem:[%s3 + $0xd8] sm:$0xff]
      %v588 = vld [vmem:[%s3 + $0xe0] sm:$0xff]
      %v589 = vld [vmem:[%s3 + $0xe8] sm:$0xff]
      %v590 = vld [vmem:[%s3 + $0xf0] sm:$0xff]
      %v591 = vld [vmem:[%s3 + $0xf8] sm:$0xff]
      %v624 = vunpack.c.l.b16 %v560
      %v625 = vunpack.c.h.b16 %v560
      %v626 = vunpack.c.l.b16 %v561
      %v627 = vunpack.c.h.b16 %v561
      %v628 = vunpack.c.l.b16 %v562
      %v629 = vunpack.c.h.b16 %v562
      %v630 = vunpack.c.l.b16 %v563
      %v631 = vunpack.c.h.b16 %v563
      %v632 = vunpack.c.l.b16 %v564
      %v633 = vunpack.c.h.b16 %v564
      %v634 = vunpack.c.l.b16 %v565
      %v635 = vunpack.c.h.b16 %v565
      %v636 = vunpack.c.l.b16 %v566
      %v637 = vunpack.c.h.b16 %v566
      %v638 = vunpack.c.l.b16 %v567
      %v639 = vunpack.c.h.b16 %v567
      %v640 = vunpack.c.l.b16 %v568
      %v641 = vunpack.c.h.b16 %v568
      %v642 = vunpack.c.l.b16 %v569
      %v643 = vunpack.c.h.b16 %v569
      %v644 = vunpack.c.l.b16 %v570
      %v645 = vunpack.c.h.b16 %v570
      %v646 = vunpack.c.l.b16 %v571
      %v647 = vunpack.c.h.b16 %v571
      %v648 = vunpack.c.l.b16 %v572
      %v649 = vunpack.c.h.b16 %v572
      %v650 = vunpack.c.l.b16 %v573
      %v651 = vunpack.c.h.b16 %v573
      %v652 = vunpack.c.l.b16 %v574
      %v653 = vunpack.c.h.b16 %v574
      %v654 = vunpack.c.l.b16 %v575
      %v655 = vunpack.c.h.b16 %v575
      %v656 = vunpack.c.l.b16 %v576
      %v657 = vunpack.c.h.b16 %v576
      %v658 = vunpack.c.l.b16 %v577
      %v659 = vunpack.c.h.b16 %v577
      %v660 = vunpack.c.l.b16 %v578
      %v661 = vunpack.c.h.b16 %v578
      %v662 = vunpack.c.l.b16 %v579
      %v663 = vunpack.c.h.b16 %v579
      %v664 = vunpack.c.l.b16 %v580
      %v665 = vunpack.c.h.b16 %v580
      %v666 = vunpack.c.l.b16 %v581
      %v667 = vunpack.c.h.b16 %v581
      %v668 = vunpack.c.l.b16 %v582
      %v669 = vunpack.c.h.b16 %v582
      %v670 = vunpack.c.l.b16 %v583
      %v671 = vunpack.c.h.b16 %v583
      %v672 = vunpack.c.l.b16 %v584
      %v673 = vunpack.c.h.b16 %v584
      %v674 = vunpack.c.l.b16 %v585
      %v675 = vunpack.c.h.b16 %v585
      %v676 = vunpack.c.l.b16 %v586
      %v677 = vunpack.c.h.b16 %v586
      %v678 = vunpack.c.l.b16 %v587
      %v679 = vunpack.c.h.b16 %v587
      %v680 = vunpack.c.l.b16 %v588
      %v681 = vunpack.c.h.b16 %v588
      %v682 = vunpack.c.l.b16 %v589
      %v683 = vunpack.c.h.b16 %v589
      %v684 = vunpack.c.l.b16 %v590
      %v685 = vunpack.c.h.b16 %v590
      %v686 = vunpack.c.l.b16 %v591
      %v687 = vunpack.c.h.b16 %v591
      %v688 = vpack.c.b16 %v626, %v624
      %v689 = vpack.c.b16 %v627, %v625
      %v690 = vpack.c.b16 %v630, %v628
      %v691 = vpack.c.b16 %v631, %v629
      %v692 = vpack.c.b16 %v634, %v632
      %v693 = vpack.c.b16 %v635, %v633
      %v694 = vpack.c.b16 %v638, %v636
      %v695 = vpack.c.b16 %v639, %v637
      %v696 = vpack.c.b16 %v642, %v640
      %v697 = vpack.c.b16 %v643, %v641
      %v698 = vpack.c.b16 %v646, %v644
      %v699 = vpack.c.b16 %v647, %v645
      %v700 = vpack.c.b16 %v650, %v648
      %v701 = vpack.c.b16 %v651, %v649
      %v702 = vpack.c.b16 %v654, %v652
      %v703 = vpack.c.b16 %v655, %v653
      %v704 = vpack.c.b16 %v658, %v656
      %v705 = vpack.c.b16 %v659, %v657
      %v706 = vpack.c.b16 %v662, %v660
      %v707 = vpack.c.b16 %v663, %v661
      %v708 = vpack.c.b16 %v666, %v664
      %v709 = vpack.c.b16 %v667, %v665
      %v710 = vpack.c.b16 %v670, %v668
      %v711 = vpack.c.b16 %v671, %v669
      %v712 = vpack.c.b16 %v674, %v672
      %v713 = vpack.c.b16 %v675, %v673
      %v714 = vpack.c.b16 %v678, %v676
      %v715 = vpack.c.b16 %v679, %v677
      %v716 = vpack.c.b16 %v682, %v680
      %v717 = vpack.c.b16 %v683, %v681
      %v718 = vpack.c.b16 %v686, %v684
      %v719 = vpack.c.b16 %v687, %v685
      %752 = vmatprep.subr.bf16.mxu0 %v689
      %753 = vmatpush1.bf16.msra.mxu0 %v688
      %754 = vmatprep.subr.bf16.mxu0 %v691
      %755 = vmatpush1.bf16.msra.mxu0 %v690
      %756 = vmatprep.subr.bf16.mxu0 %v693
      %757 = vmatpush1.bf16.msra.mxu0 %v692
      %758 = vmatprep.subr.bf16.mxu0 %v695
      %759 = vmatpush1.bf16.msra.mxu0 %v694
      %760 = vmatprep.subr.bf16.mxu0 %v697
      %761 = vmatpush1.bf16.msra.mxu0 %v696
      %762 = vmatprep.subr.bf16.mxu0 %v699
      %763 = vmatpush1.bf16.msra.mxu0 %v698
      %764 = vmatprep.subr.bf16.mxu0 %v701
      %765 = vmatpush1.bf16.msra.mxu0 %v700
      %766 = vmatprep.subr.bf16.mxu0 %v703
      %767 = vmatpush1.bf16.msra.mxu0 %v702
      %768 = vmatprep.subr.bf16.mxu0 %v705
      %769 = vmatpush1.bf16.msra.mxu0 %v704
      %770 = vmatprep.subr.bf16.mxu0 %v707
      %771 = vmatpush1.bf16.msra.mxu0 %v706
      %772 = vmatprep.subr.bf16.mxu0 %v709
      %773 = vmatpush1.bf16.msra.mxu0 %v708
      %774 = vmatprep.subr.bf16.mxu0 %v711
      %775 = vmatpush1.bf16.msra.mxu0 %v710
      %776 = vmatprep.subr.bf16.mxu0 %v713
      %777 = vmatpush1.bf16.msra.mxu0 %v712
      %778 = vmatprep.subr.bf16.mxu0 %v715
      %779 = vmatpush1.bf16.msra.mxu0 %v714
      %780 = vmatprep.subr.bf16.mxu0 %v717
      %781 = vmatpush1.bf16.msra.mxu0 %v716
      %782 = vmatprep.subr.bf16.mxu0 %v719
      %783 = vmatpush1.bf16.msra.mxu0 %v718
      %784 = vmatprep.mubr.bf16.mxu0 %v533
      %785 = vmatmul.mubr.bf16.gmra.mrb[0].mxu0 %v532
      %v786 = vpop.f32.mrb[0].mxu0
      %v787 = vadd.f32 0.0, %v786
      %v788 = vpop.f32.mrb[0].mxu0
      %v789 = vadd.f32 0.0, %v788
      %v790 = vpop.f32.mrb[0].mxu0
      %v791 = vadd.f32 0.0, %v790
      %v792 = vpop.f32.mrb[0].mxu0
      %v793 = vadd.f32 0.0, %v792
      %794 = vmatprep.mubr.bf16.mxu0 %v535
      %795 = vmatmul.mubr.bf16.gmra.mrb[0].mxu0 %v534
      %v796 = vpop.f32.mrb[0].mxu0
      %v797 = vadd.f32 0.0, %v796
      %v798 = vpop.f32.mrb[0].mxu0
      %v799 = vadd.f32 0.0, %v798
      %v800 = vpop.f32.mrb[0].mxu0
      %v801 = vadd.f32 0.0, %v800
      %v802 = vpop.f32.mrb[0].mxu0
      %v803 = vadd.f32 0.0, %v802
      %804 = vdwg.mxu0
      %v805 = vld [vmem:[%s397] sm:$0xff]
      %v806 = vld [vmem:[%s397 + $0x8] sm:$0xff]
      %v807 = vld [vmem:[%s397 + $0x10] sm:$0xff]
      %v808 = vld [vmem:[%s397 + $0x18] sm:$0xff]
      %v809 = vld [vmem:[%s372] sm:$0xff]
      %v810 = vld [vmem:[%s372 + $0x8] sm:$0xff]
      %v811 = vld [vmem:[%s372 + $0x10] sm:$0xff]
      %v812 = vld [vmem:[%s372 + $0x18] sm:$0xff]
      %v813 = vld [vmem:[%s372 + $0x20] sm:$0xff]
      %v814 = vld [vmem:[%s372 + $0x28] sm:$0xff]
      %v815 = vld [vmem:[%s372 + $0x30] sm:$0xff]
      %v816 = vld [vmem:[%s372 + $0x38] sm:$0xff]
      %v817 = vld [vmem:[%s372 + $0x40] sm:$0xff]
      %v818 = vld [vmem:[%s372 + $0x48] sm:$0xff]
      %v819 = vld [vmem:[%s372 + $0x50] sm:$0xff]
      %v820 = vld [vmem:[%s372 + $0x58] sm:$0xff]
      %v821 = vld [vmem:[%s372 + $0x60] sm:$0xff]
      %v822 = vld [vmem:[%s372 + $0x68] sm:$0xff]
      %v823 = vld [vmem:[%s372 + $0x70] sm:$0xff]
      %v824 = vld [vmem:[%s372 + $0x78] sm:$0xff]
      %v825 = vld [vmem:[%s372 + $0x80] sm:$0xff]
      %v826 = vld [vmem:[%s372 + $0x88] sm:$0xff]
      %v827 = vld [vmem:[%s372 + $0x90] sm:$0xff]
      %v828 = vld [vmem:[%s372 + $0x98] sm:$0xff]
      %v829 = vld [vmem:[%s372 + $0xa0] sm:$0xff]
      %v830 = vld [vmem:[%s372 + $0xa8] sm:$0xff]
      %vm831 = vcmask 392192
      %v833 = vsel %vm831, %v789, 0
      %v836 = vsel %vm831, %v793, 0
      %v839 = vsel %vm831, %v799, 0
      %v842 = vsel %vm831, %v803, 0
      %844 = vmatprep.subr.mxu0 0.0
      %845 = vmatpush1.msra.mxu0 %v809
      %846 = vmatprep.subr.mxu0 0.0
      %847 = vmatpush1.msra.mxu0 %v810
      %848 = vmatprep.subr.mxu0 0.0
      %849 = vmatpush1.msra.mxu0 %v811
      %850 = vmatprep.subr.mxu0 0.0
      %851 = vmatpush1.msra.mxu0 %v812
      %852 = vmatprep.subr.mxu0 0.0
      %853 = vmatpush1.msra.mxu0 %v813
      %854 = vmatprep.subr.mxu0 0.0
      %855 = vmatpush1.msra.mxu0 %v814
      %856 = vmatprep.subr.mxu0 0.0
      %857 = vmatpush1.msra.mxu0 %v815
      %858 = vmatprep.subr.mxu0 0.0
      %859 = vmatpush1.msra.mxu0 %v816
      %860 = vmatprep.subr.mxu0 0.0
      %861 = vmatpush1.msra.mxu0 %v817
      %862 = vmatprep.subr.mxu0 0.0
      %863 = vmatpush1.msra.mxu0 %v818
      %864 = vmatprep.subr.mxu0 0.0
      %865 = vmatpush1.msra.mxu0 %v819
      %866 = vmatprep.subr.mxu0 0.0
      %867 = vmatpush1.msra.mxu0 %v820
      %868 = vmatprep.subr.mxu0 0.0
      %869 = vmatpush1.msra.mxu0 %v821
      %870 = vmatprep.subr.mxu0 0.0
      %871 = vmatpush1.msra.mxu0 %v822
      %872 = vmatprep.subr.mxu0 0.0
      %873 = vmatpush1.msra.mxu0 %v823
      %874 = vmatprep.subr.mxu0 0.0
      %875 = vmatpush1.msra.mxu0 %v824
      %876 = vmatprep.subr.mxu0 0.0
      %877 = vmatpush1.msra.mxu0 %v825
      %878 = vmatprep.subr.mxu0 0.0
      %879 = vmatpush1.msra.mxu0 %v826
      %880 = vmatprep.subr.mxu0 0.0
      %881 = vmatpush1.msra.mxu0 %v827
      %882 = vmatprep.subr.mxu0 0.0
      %883 = vmatpush1.msra.mxu0 %v828
      %884 = vmatprep.subr.mxu0 0.0
      %885 = vmatpush1.msra.mxu0 %v829
      %886 = vmatprep.subr.mxu0 0.0
      %887 = vmatpush1.msra.mxu0 %v830
      %888 = vmatprep.subr.mxu0 0.0
      %889 = vmatpush1.msra.mxu0 0.0
      %890 = vmatprep.subr.mxu0 0.0
      %891 = vmatpush1.msra.mxu0 0.0
      %892 = vmatprep.subr.mxu0 0.0
      %893 = vmatpush1.msra.mxu0 0.0
      %894 = vmatprep.subr.mxu0 0.0
      %895 = vmatpush1.msra.mxu0 0.0
      %896 = vmatprep.subr.mxu0 0.0
      %897 = vmatpush1.msra.mxu0 0.0
      %898 = vmatprep.subr.mxu0 0.0
      %899 = vmatpush1.msra.mxu0 0.0
      %900 = vmatprep.subr.mxu0 0.0
      %901 = vmatpush1.msra.mxu0 0.0
      %902 = vmatprep.subr.mxu0 0.0
      %903 = vmatpush1.msra.mxu0 0.0
      %904 = vmatprep.subr.mxu0 0.0
      %905 = vmatpush1.msra.mxu0 0.0
      %906 = vmatprep.subr.mxu0 0.0
      %907 = vmatpush1.msra.mxu0 0.0
      %908 = vmatprep.mubr.f32.mxu0 %v833
      %909 = vmatmul.mubr.f32.gmra.mrb[0].mxu0 %v787
      %v910 = vpop.f32.mrb[0].mxu0
      %v911 = vadd.f32 0.0, %v910
      %v912 = vpop.f32.mrb[0].mxu0
      %913 = vmatprep.mubr.f32.mxu0 %v836
      %914 = vmatmul.mubr.f32.gmra.mrb[0].mxu0 %v791
      %v915 = vpop.f32.mrb[0].mxu0
      %v916 = vadd.f32 0.0, %v915
      %v917 = vpop.f32.mrb[0].mxu0
      %918 = vmatprep.mubr.f32.mxu0 %v839
      %919 = vmatmul.mubr.f32.gmra.mrb[0].mxu0 %v797
      %v920 = vpop.f32.mrb[0].mxu0
      %v921 = vadd.f32 0.0, %v920
      %v922 = vpop.f32.mrb[0].mxu0
      %923 = vmatprep.mubr.f32.mxu0 %v842
      %924 = vmatmul.mubr.f32.gmra.mrb[0].mxu0 %v801
      %v925 = vpop.f32.mrb[0].mxu0
      %v926 = vadd.f32 0.0, %v925
      %v927 = vpop.f32.mrb[0].mxu0
      %928 = vdwg.mxu0
      %v929 = vadd.f32 %v805, %v911
      %v930 = vadd.f32 %v806, %v916
      %v931 = vadd.f32 %v807, %v921
      %v932 = vadd.f32 %v808, %v926
      %vm933 = vcmask 990208
      %934 = vst.msk [vmem:[%s397] sm:$0xff] %vm933, %v929
      %935 = vst.msk [vmem:[%s397 + $0x8] sm:$0xff] %vm933, %v930
      %936 = vst.msk [vmem:[%s397 + $0x10] sm:$0xff] %vm933, %v931
      %937 = vst.msk [vmem:[%s397 + $0x18] sm:$0xff] %vm933, %v932
      %s938 = smul.u32 4, %s24
      %s939 = smul.u32 2, %s25
      %p940 = scmp.lt.s32.totalorder %s23, 1
      %s941 = scalar_select %p940, %s23, 1
      %p942 = scmp.lt.s32.totalorder %s938, 3
      %s943 = scalar_select %p942, %s938, 3
      %p944 = scmp.lt.s32.totalorder %s939, 1
      %s945 = scalar_select %p944, %s939, 1
      %s946 = smul.addr %s943, 2
      %s947 = sadd.s32 %s945, %s946
      %s948 = smul.addr %s941, 8
      %s949 = sadd.s32 %s947, %s948
      %s950 = smul.addr %s949, 4
      %s951 = scalar_lea.vmem %s5, %s950
      %s952 = smul.u32 4, %s24
      %p953 = scmp.lt.s32.totalorder %s23, 1
      %s954 = scalar_select %p953, %s23, 1
      %p955 = scmp.lt.s32.totalorder %s952, 3
      %s956 = scalar_select %p955, %s952, 3
      %s957 = smul.addr %s954, 4
      %s958 = sadd.s32 %s956, %s957
      %s959 = smul.addr %s958, 8
      %s960 = scalar_lea.vmem %s6, %s959
      // Predicated region
      $region45: #{spatial_pyramid_pooling.2} parent=39 // pred_check
        %p961 = pneg %p186
      $region46: #{spatial_pyramid_pooling.2} parent=39 // pred_check_branch
        %963 = sbr.rel (%p961) target = $region48
      $region47: #{spatial_pyramid_pooling.2} parent=39 // pred_region
        %s964 = smul.u32 4, %s24
        %s965 = smul.u32 2, %s25
      $region48: #{spatial_pyramid_pooling.2} parent=39 // pred_fallthru
        _
      // Predicated region
      $region49: #{spatial_pyramid_pooling.2} parent=39 // pred_check
        %p966 = pneg %p214
      $region50: #{spatial_pyramid_pooling.2} parent=39 // pred_check_branch
        %968 = sbr.rel (%p966) target = $region52
      $region51: #{spatial_pyramid_pooling.2} parent=39 // pred_region
        %s969 = smul.u32 4, %s24
      $region52: #{spatial_pyramid_pooling.2} parent=39 // pred_fallthru
        _
    $region40: #{spatial_pyramid_pooling.2} parent=5 // pred_fallthru
      _
    %p970 = scmp.le.s32.totalorder 2, %s13
    // Predicated region
    $region53: #{spatial_pyramid_pooling.2} parent=5 // pred_check
      %p971 = pneg %p970
    $region54: #{spatial_pyramid_pooling.2} parent=5 // pred_check_branch
      %973 = sbr.rel (%p971) target = $region56
    $region55: #{spatial_pyramid_pooling.2} parent=5 // pred_region
      %s974 = ssub.s32 %s13, 2
      // Predicated region
      $region57: #{spatial_pyramid_pooling.2} parent=55 // pred_check
        %p975 = pneg %p192
      $region58: #{spatial_pyramid_pooling.2} parent=55 // pred_check_branch
        %977 = sbr.rel (%p975) target = $region60
      $region59: #{spatial_pyramid_pooling.2} parent=55 // pred_region
        %s978 = smul.u32 4, %s27
        %s979 = smul.u32 2, %s28
        %p980 = scmp.lt.s32.totalorder %s26, 1
        %s981 = scalar_select %p980, %s26, 1
        %p982 = scmp.lt.s32.totalorder %s978, 3
        %s983 = scalar_select %p982, %s978, 3
        %p984 = scmp.lt.s32.totalorder %s979, 1
        %s985 = scalar_select %p984, %s979, 1
        %s986 = smul.addr %s983, 2
        %s987 = sadd.s32 %s985, %s986
        %s988 = smul.addr %s981, 8
        %s989 = sadd.s32 %s987, %s988
        %s990 = smul.addr %s989, 4
        %s991 = scalar_lea.vmem %s5, %s990
      $region60: #{spatial_pyramid_pooling.2} parent=55 // pred_fallthru
        _
      // Predicated region
      $region61: #{spatial_pyramid_pooling.2} parent=55 // pred_check
        %p992 = pneg %p220
      $region62: #{spatial_pyramid_pooling.2} parent=55 // pred_check_branch
        %994 = sbr.rel (%p992) target = $region64
      $region63: #{spatial_pyramid_pooling.2} parent=55 // pred_region
        %s995 = smul.u32 4, %s27
        %p996 = scmp.lt.s32.totalorder %s26, 1
        %s997 = scalar_select %p996, %s26, 1
        %p998 = scmp.lt.s32.totalorder %s995, 3
        %s999 = scalar_select %p998, %s995, 3
        %s1000 = smul.addr %s997, 4
        %s1001 = sadd.s32 %s999, %s1000
        %s1002 = smul.addr %s1001, 8
        %s1003 = scalar_lea.vmem %s6, %s1002
      $region64: #{spatial_pyramid_pooling.2} parent=55 // pred_fallthru
        _
    $region56: #{spatial_pyramid_pooling.2} parent=5 // pred_fallthru
      _
  $region6: #{spatial_pyramid_pooling.2} parent=0 // loop_footer
    %s17 = sadd.s32 1, %s13
  $region7: #{spatial_pyramid_pooling.2} parent=0 // loop_footer_branch
    %12 = sbr.rel target = $region3
  $region8: #{spatial_pyramid_pooling.2} parent=0 // loop_exit
    _

// kernel: spatial_pyramid_pooling.3
$region0: #{spatial_pyramid_pooling.3}
  #allocation0 [shape = 'u32[]', space=smem, size = 0x4, offset = 0x4, fixed_abs, tag = 'smem constant byte address 0x4 - core index']
  #allocation1 [shape = 'u32[144,128]{1,0:T(1,128)}', space=vmem, size = 0x12000, scoped, tag = 'internal scratch']
  %s0 = inlined_call_operand.vmem [shape: bf16[2,32,256], index: 0, kind: input, shape index: {}]
  %s1 = inlined_call_operand.vmem [shape: bf16[16,32], index: 1, kind: input, shape index: {}]
  %s2 = inlined_call_operand.vmem [shape: f32[2,16,121], index: 2, kind: input, shape index: {}]
  %s3 = inlined_call_operand.vmem [shape: f32[1,121,176], index: 3, kind: input, shape index: {}]
  %s4 = inlined_call_operand.vmem [shape: bf16[176,256], index: 4, kind: input, shape index: {}]
  %s5 = inlined_call_operand.vmem [shape: f32[16,1], index: 5, kind: input, shape index: {}]
  %s6 = inlined_call_operand.vmem [shape: f32[2,16,256], index: 6, kind: output, shape index: {}]
  %s7 = sld [smem:[#allocation0]]
  $region57: #{spatial_pyramid_pooling.3} parent=0
    _
  %s9 = ssub.s32 1, %s7
  %s10 = scalar_select 0, %s9, %s7
  loop: start=0, step=1, limit=4
  $region2: #{spatial_pyramid_pooling.3} parent=0 // loop_pre_header
    _
  $region3: #{spatial_pyramid_pooling.3} parent=0 // loop_header
    %s12 = sphi 0, %s16
    %p13 = scmp.ge.s32.totalorder %s12, 4
    %s19 = sphi 0, %s38
    %s20 = sphi 0, %s34
    %s21 = sphi 0, %s30
    %s22 = sphi 0, %s19
    %s23 = sphi 0, %s20
    %s24 = sphi 0, %s21
    %s25 = sphi 0, %s22
    %s26 = sphi 0, %s23
    %s27 = sphi 0, %s24
    %s43 = sphi 0, %s45
    %s46 = sphi 0, %s43
    %s47 = sphi 0, %s46
    %s63 = sphi 0, %s47
    %s69 = sphi 0, %s71
    %s72 = sphi 0, %s69
    %s73 = sphi 0, %s72
    %s89 = sphi 0, %s73
    %s97 = sphi 0, %s99
    %s100 = sphi 0, %s97
    %s101 = sphi 0, %s100
    %s117 = sphi 0, %s101
    %s123 = sphi 0, %s125
    %s126 = sphi 0, %s123
    %s127 = sphi 0, %s126
    %s143 = sphi 0, %s127
    %s147 = sphi 0, %s147
    %s149 = sphi 0, %s147
    %s150 = sphi 0, %s149
    %s164 = sphi 0, %s150
    %s170 = sphi 0, %s172
    %s173 = sphi 0, %s170
    %s174 = sphi 0, %s173
    %s190 = sphi 0, %s174
    %s200 = sphi 0, %s202
    %s203 = sphi 0, %s200
    %s204 = sphi 0, %s203
    %s220 = sphi 0, %s204
  $region4: #{spatial_pyramid_pooling.3} parent=0 // loop_header_branch
    %15 = sbr.rel (%p13) target = $region8
  $region5: #{spatial_pyramid_pooling.3} parent=0 // loop_body
    %s17 = ssub.s32 %s12, 1
    %s18 = ssub.s32 %s12, 2
    %s28 = sadd.s32 1, %s21
    %p29 = scmp.ge.s32.totalorder %s28, 1
    %s30 = scalar_select %p29, 0, %s28
    %s31 = sadd.s32 1, %s20
    %s32 = scalar_select %p29, %s31, %s20
    %p33 = scmp.ge.s32.totalorder %s32, 1
    %s34 = scalar_select %p33, 0, %s32
    %s35 = sadd.s32 1, %s19
    %s36 = scalar_select %p33, %s35, %s19
    %p37 = scmp.ge.s32.totalorder %s36, 2
    %s38 = scalar_select %p37, 0, %s36
    %s39 = ssub.s32 %s19, %s38
    %s40 = ssub.s32 %s21, %s30
    %s41 = sor.u32 %s39, %s40
    %p42 = scmp.eq.s32.totalorder %s41, 0
    %s44 = sadd.s32 %s43, 1
    %s45 = scalar_select %p42, %s43, %s44
    %p48 = pneg %p42
    %p49 = scmp.eq.s32.totalorder %s12, 1
    %p50 = por %p48, %p49
    %p51 = scmp.ne.s32.totalorder %s43, %s46
    %p52 = scmp.eq.s32.totalorder %s12, 0
    %p53 = por %p51, %p52
    %p54 = scmp.ne.s32.totalorder %s43, %s46
    %p55 = scmp.eq.s32.totalorder %s17, 1
    %p56 = por %p54, %p55
    %p57 = scmp.ne.s32.totalorder %s46, %s47
    %p58 = scmp.eq.s32.totalorder %s17, 0
    %p59 = por %p57, %p58
    %p60 = scmp.ne.s32.totalorder %s46, %s47
    %p61 = scmp.eq.s32.totalorder %s18, 1
    %p62 = por %p60, %p61
    %p64 = scmp.ne.s32.totalorder %s47, %s63
    %p65 = scmp.eq.s32.totalorder %s18, 0
    %p66 = por %p64, %p65
    %s67 = ssub.s32 %s20, %s34
    %p68 = scmp.eq.s32.totalorder %s67, 0
    %s70 = sadd.s32 %s69, 1
    %s71 = scalar_select %p68, %s69, %s70
    %p74 = pneg %p68
    %p75 = scmp.eq.s32.totalorder %s12, 1
    %p76 = por %p74, %p75
    %p77 = scmp.ne.s32.totalorder %s69, %s72
    %p78 = scmp.eq.s32.totalorder %s12, 0
    %p79 = por %p77, %p78
    %p80 = scmp.ne.s32.totalorder %s69, %s72
    %p81 = scmp.eq.s32.totalorder %s17, 1
    %p82 = por %p80, %p81
    %p83 = scmp.ne.s32.totalorder %s72, %s73
    %p84 = scmp.eq.s32.totalorder %s17, 0
    %p85 = por %p83, %p84
    %p86 = scmp.ne.s32.totalorder %s72, %s73
    %p87 = scmp.eq.s32.totalorder %s18, 1
    %p88 = por %p86, %p87
    %p90 = scmp.ne.s32.totalorder %s73, %s89
    %p91 = scmp.eq.s32.totalorder %s18, 0
    %p92 = por %p90, %p91
    %s93 = ssub.s32 %s19, %s38
    %s94 = ssub.s32 %s20, %s34
    %s95 = sor.u32 %s93, %s94
    %p96 = scmp.eq.s32.totalorder %s95, 0
    %s98 = sadd.s32 %s97, 1
    %s99 = scalar_select %p96, %s97, %s98
    %p102 = pneg %p96
    %p103 = scmp.eq.s32.totalorder %s12, 1
    %p104 = por %p102, %p103
    %p105 = scmp.ne.s32.totalorder %s97, %s100
    %p106 = scmp.eq.s32.totalorder %s12, 0
    %p107 = por %p105, %p106
    %p108 = scmp.ne.s32.totalorder %s97, %s100
    %p109 = scmp.eq.s32.totalorder %s17, 1
    %p110 = por %p108, %p109
    %p111 = scmp.ne.s32.totalorder %s100, %s101
    %p112 = scmp.eq.s32.totalorder %s17, 0
    %p113 = por %p111, %p112
    %p114 = scmp.ne.s32.totalorder %s100, %s101
    %p115 = scmp.eq.s32.totalorder %s18, 1
    %p116 = por %p114, %p115
    %p118 = scmp.ne.s32.totalorder %s101, %s117
    %p119 = scmp.eq.s32.totalorder %s18, 0
    %p120 = por %p118, %p119
    %s121 = ssub.s32 %s21, %s30
    %p122 = scmp.eq.s32.totalorder %s121, 0
    %s124 = sadd.s32 %s123, 1
    %s125 = scalar_select %p122, %s123, %s124
    %p128 = pneg %p122
    %p129 = scmp.eq.s32.totalorder %s12, 1
    %p130 = por %p128, %p129
    %p131 = scmp.ne.s32.totalorder %s123, %s126
    %p132 = scmp.eq.s32.totalorder %s12, 0
    %p133 = por %p131, %p132
    %p134 = scmp.ne.s32.totalorder %s123, %s126
    %p135 = scmp.eq.s32.totalorder %s17, 1
    %p136 = por %p134, %p135
    %p137 = scmp.ne.s32.totalorder %s126, %s127
    %p138 = scmp.eq.s32.totalorder %s17, 0
    %p139 = por %p137, %p138
    %p140 = scmp.ne.s32.totalorder %s126, %s127
    %p141 = scmp.eq.s32.totalorder %s18, 1
    %p142 = por %p140, %p141
    %p144 = scmp.ne.s32.totalorder %s127, %s143
    %p145 = scmp.eq.s32.totalorder %s18, 0
    %p146 = por %p144, %p145
    %s148 = sadd.s32 %s147, 1
    %p151 = scmp.eq.s32.totalorder %s12, 1
    %p152 = scmp.ne.s32.totalorder %s147, %s149
    %p153 = scmp.eq.s32.totalorder %s12, 0
    %p154 = por %p152, %p153
    %p155 = scmp.ne.s32.totalorder %s147, %s149
    %p156 = scmp.eq.s32.totalorder %s17, 1
    %p157 = por %p155, %p156
    %p158 = scmp.ne.s32.totalorder %s149, %s150
    %p159 = scmp.eq.s32.totalorder %s17, 0
    %p160 = por %p158, %p159
    %p161 = scmp.ne.s32.totalorder %s149, %s150
    %p162 = scmp.eq.s32.totalorder %s18, 1
    %p163 = por %p161, %p162
    %p165 = scmp.ne.s32.totalorder %s150, %s164
    %p166 = scmp.eq.s32.totalorder %s18, 0
    %p167 = por %p165, %p166
    %s168 = ssub.s32 %s20, %s34
    %p169 = scmp.eq.s32.totalorder %s168, 0
    %s171 = sadd.s32 %s170, 1
    %s172 = scalar_select %p169, %s170, %s171
    %p175 = pneg %p169
    %p176 = scmp.eq.s32.totalorder %s12, 1
    %p177 = por %p175, %p176
    %p178 = scmp.ne.s32.totalorder %s170, %s173
    %p179 = scmp.eq.s32.totalorder %s12, 0
    %p180 = por %p178, %p179
    %p181 = scmp.ne.s32.totalorder %s170, %s173
    %p182 = scmp.eq.s32.totalorder %s17, 1
    %p183 = por %p181, %p182
    %p184 = scmp.ne.s32.totalorder %s173, %s174
    %p185 = scmp.eq.s32.totalorder %s17, 0
    %p186 = por %p184, %p185
    %p187 = scmp.ne.s32.totalorder %s173, %s174
    %p188 = scmp.eq.s32.totalorder %s18, 1
    %p189 = por %p187, %p188
    %p191 = scmp.ne.s32.totalorder %s174, %s190
    %p192 = scmp.eq.s32.totalorder %s18, 0
    %p193 = por %p191, %p192
    %s194 = ssub.s32 %s19, %s38
    %s195 = ssub.s32 %s20, %s34
    %s196 = sor.u32 %s194, %s195
    %s197 = ssub.s32 %s21, %s30
    %s198 = sor.u32 %s196, %s197
    %p199 = scmp.eq.s32.totalorder %s198, 0
    %s201 = sadd.s32 %s200, 1
    %s202 = scalar_select %p199, %s200, %s201
    %p205 = pneg %p199
    %p206 = scmp.eq.s32.totalorder %s12, 1
    %p207 = por %p205, %p206
    %p208 = scmp.ne.s32.totalorder %s200, %s203
    %p209 = scmp.eq.s32.totalorder %s12, 0
    %p210 = por %p208, %p209
    %p211 = scmp.ne.s32.totalorder %s200, %s203
    %p212 = scmp.eq.s32.totalorder %s17, 1
    %p213 = por %p211, %p212
    %p214 = scmp.ne.s32.totalorder %s203, %s204
    %p215 = scmp.eq.s32.totalorder %s17, 0
    %p216 = por %p214, %p215
    %p217 = scmp.ne.s32.totalorder %s203, %s204
    %p218 = scmp.eq.s32.totalorder %s18, 1
    %p219 = por %p217, %p218
    %p221 = scmp.ne.s32.totalorder %s204, %s220
    %p222 = scmp.eq.s32.totalorder %s18, 0
    %p223 = por %p221, %p222
    %p224 = scmp.le.s32.totalorder 1, %s12
    %p225 = scmp.lt.s32.totalorder %s12, 3
    %p226 = pnand %p224, %p225
    %p227 = pneg %p226
    // Predicated region
    $region9: #{spatial_pyramid_pooling.3} parent=5 // pred_check
      _
    $region10: #{spatial_pyramid_pooling.3} parent=5 // pred_check_branch
      %229 = sbr.rel (%p226) target = $region12
    $region11: #{spatial_pyramid_pooling.3} parent=5 // pred_region
      %s230 = ssub.s32 %s12, 1
      // Predicated region
      $region13: #{spatial_pyramid_pooling.3} parent=11 // pred_check
        %p231 = pneg %p85
      $region14: #{spatial_pyramid_pooling.3} parent=11 // pred_check_branch
        %233 = sbr.rel (%p231) target = $region16
      $region15: #{spatial_pyramid_pooling.3} parent=11 // pred_region
        %s234 = smul.u32 2, %s23
        %p235 = scmp.lt.s32.totalorder %s234, 1
        %s236 = scalar_select %p235, %s234, 1
        %s237 = smul.addr %s236, 4
        %s238 = scalar_lea.vmem %s1, %s237
        %s239 = smul.u32 2, %s23
      $region16: #{spatial_pyramid_pooling.3} parent=11 // pred_fallthru
        _
      // Predicated region
      $region17: #{spatial_pyramid_pooling.3} parent=11 // pred_check
        %p240 = pneg %p139
      $region18: #{spatial_pyramid_pooling.3} parent=11 // pred_check_branch
        %242 = sbr.rel (%p240) target = $region20
      $region19: #{spatial_pyramid_pooling.3} parent=11 // pred_region
        %p243 = scmp.lt.s32.totalorder %s24, 0
        %s244 = scalar_select %p243, %s24, 0
        %s245 = smul.addr %s244, 32
        %s246 = smul.addr %s245, 8
        %s247 = scalar_lea.vmem %s3, %s246
      $region20: #{spatial_pyramid_pooling.3} parent=11 // pred_fallthru
        _
      // Predicated region
      $region21: #{spatial_pyramid_pooling.3} parent=11 // pred_check
        %p248 = pneg %p160
      $region22: #{spatial_pyramid_pooling.3} parent=11 // pred_check_branch
        %250 = sbr.rel (%p248) target = $region24
      $region23: #{spatial_pyramid_pooling.3} parent=11 // pred_region
        _
      $region24: #{spatial_pyramid_pooling.3} parent=11 // pred_fallthru
        _
      // Predicated region
      $region25: #{spatial_pyramid_pooling.3} parent=11 // pred_check
        %p251 = pneg %p186
      $region26: #{spatial_pyramid_pooling.3} parent=11 // pred_check_branch
        %253 = sbr.rel (%p251) target = $region28
      $region27: #{spatial_pyramid_pooling.3} parent=11 // pred_region
        %s254 = smul.u32 2, %s23
        %p255 = scmp.lt.s32.totalorder %s254, 1
        %s256 = scalar_select %p255, %s254, 1
        %s257 = smul.addr %s256, 8
        %s258 = scalar_lea.vmem %s5, %s257
        %s259 = smul.u32 2, %s23
      $region28: #{spatial_pyramid_pooling.3} parent=11 // pred_fallthru
        _
    $region12: #{spatial_pyramid_pooling.3} parent=5 // pred_fallthru
      _
    %p260 = scmp.lt.s32.totalorder %s12, 2
    // Predicated region
    $region29: #{spatial_pyramid_pooling.3} parent=5 // pred_check
      %p261 = pneg %p260
    $region30: #{spatial_pyramid_pooling.3} parent=5 // pred_check_branch
      %263 = sbr.rel (%p261) target = $region32
    $region31: #{spatial_pyramid_pooling.3} parent=5 // pred_region
      // Predicated region
      $region33: #{spatial_pyramid_pooling.3} parent=31 // pred_check
        %p264 = pneg %p53
      $region34: #{spatial_pyramid_pooling.3} parent=31 // pred_check_branch
        %266 = sbr.rel (%p264) target = $region36
      $region35: #{spatial_pyramid_pooling.3} parent=31 // pred_region
        %s267 = smul.u32 2, %s21
        %p268 = scmp.lt.s32.totalorder %s19, 1
        %s269 = scalar_select %p268, %s19, 1
        %p270 = scmp.lt.s32.totalorder %s267, 1
        %s271 = scalar_select %p270, %s267, 1
        %s272 = smul.addr %s269, 8
        %s273 = sadd.s32 %s271, %s272
        %s274 = smul.addr %s273, 4
        %s275 = scalar_lea.vmem %s0, %s274
        %s276 = smul.u32 2, %s21
      $region36: #{spatial_pyramid_pooling.3} parent=31 // pred_fallthru
        _
      // Predicated region
      $region37: #{spatial_pyramid_pooling.3} parent=31 // pred_check
        %p277 = pneg %p107
      $region38: #{spatial_pyramid_pooling.3} parent=31 // pred_check_branch
        %279 = sbr.rel (%p277) target = $region40
      $region39: #{spatial_pyramid_pooling.3} parent=31 // pred_region
        %s280 = smul.u32 2, %s20
        %p281 = scmp.lt.s32.totalorder %s19, 1
        %s282 = scalar_select %p281, %s19, 1
        %p283 = scmp.lt.s32.totalorder %s280, 1
        %s284 = scalar_select %p283, %s280, 1
        %s285 = smul.addr %s282, 2
        %s286 = sadd.s32 %s284, %s285
        %s287 = smul.addr %s286, 8
        %s288 = scalar_lea.vmem %s2, %s287
        %s289 = smul.u32 2, %s20
      $region40: #{spatial_pyramid_pooling.3} parent=31 // pred_fallthru
        _
    $region32: #{spatial_pyramid_pooling.3} parent=5 // pred_fallthru
      _
    %p290 = scmp.le.s32.totalorder 1, %s12
    %p291 = scmp.lt.s32.totalorder %s12, 3
    %p292 = pnand %p290, %p291
    %p293 = pneg %p292
    // Predicated region
    $region41: #{spatial_pyramid_pooling.3} parent=5 // pred_check
      _
    $region42: #{spatial_pyramid_pooling.3} parent=5 // pred_check_branch
      %295 = sbr.rel (%p292) target = $region44
    $region43: #{spatial_pyramid_pooling.3} parent=5 // pred_region
      %s296 = ssub.s32 %s12, 1
      %s297 = smul.u32 2, %s24
      %p298 = scmp.lt.s32.totalorder %s22, 1
      %s299 = scalar_select %p298, %s22, 1
      %p300 = scmp.lt.s32.totalorder %s297, 1
      %s301 = scalar_select %p300, %s297, 1
      %s302 = smul.addr %s299, 8
      %s303 = sadd.s32 %s301, %s302
      %s304 = smul.addr %s303, 4
      %s305 = scalar_lea.vmem %s0, %s304
      %p306 = pneg %p59
      %p307 = pneg %p56
      %s308 = smul.u32 2, %s23
      %p309 = scmp.lt.s32.totalorder %s308, 1
      %s310 = scalar_select %p309, %s308, 1
      %s311 = smul.addr %s310, 4
      %s312 = scalar_lea.vmem %s1, %s311
      %p313 = pneg %p85
      %p314 = pneg %p82
      %s315 = smul.u32 2, %s23
      %p316 = scmp.lt.s32.totalorder %s22, 1
      %s317 = scalar_select %p316, %s22, 1
      %p318 = scmp.lt.s32.totalorder %s315, 1
      %s319 = scalar_select %p318, %s315, 1
      %s320 = smul.addr %s317, 2
      %s321 = sadd.s32 %s319, %s320
      %s322 = smul.addr %s321, 8
      %s323 = scalar_lea.vmem %s2, %s322
      %p324 = pneg %p113
      %p325 = pneg %p110
      %p326 = scmp.lt.s32.totalorder %s24, 0
      %s327 = scalar_select %p326, %s24, 0
      %s328 = smul.addr %s327, 32
      %s329 = smul.addr %s328, 8
      %s330 = scalar_lea.vmem %s3, %s329
      %p331 = pneg %p139
      %p332 = pneg %p136
      %p333 = pneg %p160
      %p334 = pneg %p157
      %s335 = smul.u32 2, %s23
      %p336 = scmp.lt.s32.totalorder %s335, 1
      %s337 = scalar_select %p336, %s335, 1
      %s338 = smul.addr %s337, 8
      %s339 = scalar_lea.vmem %s5, %s338
      %p340 = pneg %p186
      %p341 = pneg %p183
      %p342 = pneg %p216
      %p343 = pneg %p213
      %s344 = smul.u32 2, %s23
      %s345 = smul.u32 2, %s24
      %p346 = scmp.lt.s32.totalorder %s22, 1
      %s347 = scalar_select %p346, %s22, 1
      %p348 = scmp.lt.s32.totalorder %s344, 1
      %s349 = scalar_select %p348, %s344, 1
      %p350 = scmp.lt.s32.totalorder %s345, 1
      %s351 = scalar_select %p350, %s345, 1
      %s352 = smul.addr %s349, 2
      %s353 = sadd.s32 %s351, %s352
      %s354 = smul.addr %s347, 4
      %s355 = sadd.s32 %s353, %s354
      %s356 = smul.addr %s355, 8
      %s357 = scalar_lea.vmem %s6, %s356
      %s358 = smul.u32 2, %s24
      %p359 = scmp.lt.s32.totalorder %s22, 1
      %s360 = scalar_select %p359, %s22, 1
      %p361 = scmp.lt.s32.totalorder %s358, 1
      %s362 = scalar_select %p361, %s358, 1
      %s363 = smul.addr %s360, 8
      %s364 = sadd.s32 %s362, %s363
      %s365 = smul.addr %s364, 4
      %s366 = scalar_lea.vmem %s0, %s365
      %s367 = smul.u32 2, %s24
      %s368 = smul.u32 2, %s23
      %p369 = scmp.lt.s32.totalorder %s368, 1
      %s370 = scalar_select %p369, %s368, 1
      %s371 = smul.addr %s370, 4
      %s372 = scalar_lea.vmem %s1, %s371
      %s373 = smul.u32 2, %s23
      %s374 = smul.u32 2, %s23
      %p375 = scmp.lt.s32.totalorder %s22, 1
      %s376 = scalar_select %p375, %s22, 1
      %p377 = scmp.lt.s32.totalorder %s374, 1
      %s378 = scalar_select %p377, %s374, 1
      %s379 = smul.addr %s376, 2
      %s380 = sadd.s32 %s378, %s379
      %s381 = smul.addr %s380, 8
      %s382 = scalar_lea.vmem %s2, %s381
      %s383 = smul.u32 2, %s23
      %p384 = scmp.lt.s32.totalorder %s24, 0
      %s385 = scalar_select %p384, %s24, 0
      %s386 = smul.addr %s385, 32
      %s387 = smul.addr %s386, 8
      %s388 = scalar_lea.vmem %s3, %s387
      %s389 = smul.u32 2, %s23
      %p390 = scmp.lt.s32.totalorder %s389, 1
      %s391 = scalar_select %p390, %s389, 1
      %s392 = smul.addr %s391, 8
      %s393 = scalar_lea.vmem %s5, %s392
      %s394 = smul.u32 2, %s23
      %s395 = smul.u32 2, %s23
      %s396 = smul.u32 2, %s24
      %p397 = scmp.lt.s32.totalorder %s22, 1
      %s398 = scalar_select %p397, %s22, 1
      %p399 = scmp.lt.s32.totalorder %s395, 1
      %s400 = scalar_select %p399, %s395, 1
      %p401 = scmp.lt.s32.totalorder %s396, 1
      %s402 = scalar_select %p401, %s396, 1
      %s403 = smul.addr %s400, 2
      %s404 = sadd.s32 %s402, %s403
      %s405 = smul.addr %s398, 4
      %s406 = sadd.s32 %s404, %s405
      %s407 = smul.addr %s406, 8
      %s408 = scalar_lea.vmem %s6, %s407
      %s409 = smul.u32 2, %s23
      %s410 = smul.u32 2, %s24
      %v412 = vld [vmem:[%s372] sm:$0xf]
      %v413 = vld [vmem:[%s372 + $0x4] sm:$0xf]
      %v414 = vld [vmem:[%s366] sm:$0xff]
      %v415 = vld [vmem:[%s366 + $0x8] sm:$0xff]
      %v416 = vld [vmem:[%s366 + $0x10] sm:$0xff]
      %v417 = vld [vmem:[%s366 + $0x18] sm:$0xff]
      %v418 = vld [vmem:[%s382] sm:$0xff]
      %v419 = vld [vmem:[%s382 + $0x8] sm:$0xff]
      %v420 = vld [vmem:[%s388] sm:$0xff]
      %v421 = vld [vmem:[%s388 + $0x8] sm:$0xff]
      %v422 = vld [vmem:[%s388 + $0x10] sm:$0xff]
      %v423 = vld [vmem:[%s388 + $0x18] sm:$0xff]
      %v424 = vld [vmem:[%s388 + $0x20] sm:$0xff]
      %v425 = vld [vmem:[%s388 + $0x28] sm:$0xff]
      %v426 = vld [vmem:[%s388 + $0x30] sm:$0xff]
      %v427 = vld [vmem:[%s388 + $0x38] sm:$0xff]
      %v428 = vld [vmem:[%s388 + $0x40] sm:$0xff]
      %v429 = vld [vmem:[%s388 + $0x48] sm:$0xff]
      %v430 = vld [vmem:[%s388 + $0x50] sm:$0xff]
      %v431 = vld [vmem:[%s388 + $0x58] sm:$0xff]
      %v432 = vld [vmem:[%s388 + $0x60] sm:$0xff]
      %v433 = vld [vmem:[%s388 + $0x68] sm:$0xff]
      %v434 = vld [vmem:[%s388 + $0x70] sm:$0xff]
      %v435 = vld [vmem:[%s388 + $0x78] sm:$0xff]
      %v436 = vld [vmem:[%s388 + $0x80] sm:$0xff]
      %v437 = vld [vmem:[%s388 + $0x88] sm:$0xff]
      %v438 = vld [vmem:[%s388 + $0x90] sm:$0xff]
      %v439 = vld [vmem:[%s388 + $0x98] sm:$0xff]
      %v440 = vld [vmem:[%s388 + $0xa0] sm:$0xff]
      %v441 = vld [vmem:[%s388 + $0xa8] sm:$0xff]
      %v442 = vld [vmem:[%s388 + $0xb0] sm:$0xff]
      %v443 = vld [vmem:[%s388 + $0xb8] sm:$0xff]
      %v444 = vld [vmem:[%s388 + $0xc0] sm:$0xff]
      %v445 = vld [vmem:[%s388 + $0xc8] sm:$0xff]
      %v446 = vld [vmem:[%s388 + $0xd0] sm:$0xff]
      %v447 = vld [vmem:[%s388 + $0xd8] sm:$0xff]
      %v448 = vld [vmem:[%s388 + $0xe0] sm:$0xff]
      %v449 = vld [vmem:[%s388 + $0xe8] sm:$0xff]
      %v450 = vld [vmem:[%s388 + $0xf0] sm:$0x1]
      %v451 = vld [vmem:[%s388 + $0xf8] sm:$0x1]
      %vm452 = vcmask 990208
      %v454 = vsel %vm452, %v418, 0
      %v457 = vsel %vm452, %v419, 0
      %vm459 = vcmask 1040384
      %v461 = vsel %vm459, %v450, 0
      %v464 = vsel %vm459, %v451, 0
      %466 = vmatprep.subr.mxu0 %v421
      %467 = vmatpush1.msra.mxu0 %v420
      %468 = vmatprep.subr.mxu0 %v423
      %469 = vmatpush1.msra.mxu0 %v422
      %470 = vmatprep.subr.mxu0 %v425
      %471 = vmatpush1.msra.mxu0 %v424
      %472 = vmatprep.subr.mxu0 %v427
      %473 = vmatpush1.msra.mxu0 %v426
      %474 = vmatprep.subr.mxu0 %v429
      %475 = vmatpush1.msra.mxu0 %v428
      %476 = vmatprep.subr.mxu0 %v431
      %477 = vmatpush1.msra.mxu0 %v430
      %478 = vmatprep.subr.mxu0 %v433
      %479 = vmatpush1.msra.mxu0 %v432
      %480 = vmatprep.subr.mxu0 %v435
      %481 = vmatpush1.msra.mxu0 %v434
      %482 = vmatprep.subr.mxu0 %v437
      %483 = vmatpush1.msra.mxu0 %v436
      %484 = vmatprep.subr.mxu0 %v439
      %485 = vmatpush1.msra.mxu0 %v438
      %486 = vmatprep.subr.mxu0 %v441
      %487 = vmatpush1.msra.mxu0 %v440
      %488 = vmatprep.subr.mxu0 %v443
      %489 = vmatpush1.msra.mxu0 %v442
      %490 = vmatprep.subr.mxu0 %v445
      %491 = vmatpush1.msra.mxu0 %v444
      %492 = vmatprep.subr.mxu0 %v447
      %493 = vmatpush1.msra.mxu0 %v446
      %494 = vmatprep.subr.mxu0 %v449
      %495 = vmatpush1.msra.mxu0 %v448
      %496 = vmatprep.subr.mxu0 %v464
      %497 = vmatpush1.msra.mxu0 %v461
      %498 = vmatprep.subr.mxu0 0.0
      %499 = vmatpush1.msra.mxu0 0.0
      %500 = vmatprep.subr.mxu0 0.0
      %501 = vmatpush1.msra.mxu0 0.0
      %502 = vmatprep.subr.mxu0 0.0
      %503 = vmatpush1.msra.mxu0 0.0
      %504 = vmatprep.subr.mxu0 0.0
      %505 = vmatpush1.msra.mxu0 0.0
      %506 = vmatprep.subr.mxu0 0.0
      %507 = vmatpush1.msra.mxu0 0.0
      %508 = vmatprep.subr.mxu0 0.0
      %509 = vmatpush1.msra.mxu0 0.0
      %510 = vmatprep.subr.mxu0 0.0
      %511 = vmatpush1.msra.mxu0 0.0
      %512 = vmatprep.subr.mxu0 0.0
      %513 = vmatpush1.msra.mxu0 0.0
      %514 = vmatprep.subr.mxu0 0.0
      %515 = vmatpush1.msra.mxu0 0.0
      %516 = vmatprep.subr.mxu0 0.0
      %517 = vmatpush1.msra.mxu0 0.0
      %518 = vmatprep.subr.mxu0 0.0
      %519 = vmatpush1.msra.mxu0 0.0
      %520 = vmatprep.subr.mxu0 0.0
      %521 = vmatpush1.msra.mxu0 0.0
      %522 = vmatprep.subr.mxu0 0.0
      %523 = vmatpush1.msra.mxu0 0.0
      %524 = vmatprep.subr.mxu0 0.0
      %525 = vmatpush1.msra.mxu0 0.0
      %526 = vmatprep.subr.mxu0 0.0
      %527 = vmatpush1.msra.mxu0 0.0
      %528 = vmatprep.subr.mxu0 0.0
      %529 = vmatpush1.msra.mxu0 0.0
      %530 = vmatprep.mubr.f32.mxu0 0.0
      %531 = vmatmul.mubr.f32.gmra.mrb[0].mxu0 %v454
      %v532 = vpop.f32.mrb[0].mxu0
      %v533 = vadd.f32 0.0, %v532
      %v534 = vpop.f32.mrb[0].mxu0
      %v535 = vadd.f32 0.0, %v534
      %536 = vmatprep.mubr.f32.mxu0 0.0
      %537 = vmatmul.mubr.f32.gmra.mrb[0].mxu0 %v457
      %v538 = vpop.f32.mrb[0].mxu0
      %v539 = vadd.f32 0.0, %v538
      %v540 = vpop.f32.mrb[0].mxu0
      %v541 = vadd.f32 0.0, %v540
      %542 = vdwg.mxu0
      %v543 = vpack.c.bf16 %v539, %v533
      %v544 = vpack.c.bf16 %v541, %v535
      %v545 = vld [vmem:[%s4] sm:$0xff]
      %v546 = vld [vmem:[%s4 + $0x8] sm:$0xff]
      %v547 = vld [vmem:[%s4 + $0x10] sm:$0xff]
      %v548 = vld [vmem:[%s4 + $0x18] sm:$0xff]
      %v549 = vld [vmem:[%s4 + $0x20] sm:$0xff]
      %v550 = vld [vmem:[%s4 + $0x28] sm:$0xff]
      %v551 = vld [vmem:[%s4 + $0x30] sm:$0xff]
      %v552 = vld [vmem:[%s4 + $0x38] sm:$0xff]
      %v553 = vld [vmem:[%s4 + $0x40] sm:$0xff]
      %v554 = vld [vmem:[%s4 + $0x48] sm:$0xff]
      %v555 = vld [vmem:[%s4 + $0x50] sm:$0xff]
      %v556 = vld [vmem:[%s4 + $0x58] sm:$0xff]
      %v557 = vld [vmem:[%s4 + $0x60] sm:$0xff]
      %v558 = vld [vmem:[%s4 + $0x68] sm:$0xff]
      %v559 = vld [vmem:[%s4 + $0x70] sm:$0xff]
      %v560 = vld [vmem:[%s4 + $0x78] sm:$0xff]
      %v561 = vld [vmem:[%s4 + $0x80] sm:$0xff]
      %v562 = vld [vmem:[%s4 + $0x88] sm:$0xff]
      %v563 = vld [vmem:[%s4 + $0x90] sm:$0xff]
      %v564 = vld [vmem:[%s4 + $0x98] sm:$0xff]
      %v565 = vld [vmem:[%s4 + $0xa0] sm:$0xff]
      %v566 = vld [vmem:[%s4 + $0xa8] sm:$0xff]
      %v589 = vunpack.c.l.b16 %v545
      %v590 = vunpack.c.h.b16 %v545
      %v591 = vunpack.c.l.b16 %v546
      %v592 = vunpack.c.h.b16 %v546
      %v593 = vunpack.c.l.b16 %v547
      %v594 = vunpack.c.h.b16 %v547
      %v595 = vunpack.c.l.b16 %v548
      %v596 = vunpack.c.h.b16 %v548
      %v597 = vunpack.c.l.b16 %v549
      %v598 = vunpack.c.h.b16 %v549
      %v599 = vunpack.c.l.b16 %v550
      %v600 = vunpack.c.h.b16 %v550
      %v601 = vunpack.c.l.b16 %v551
      %v602 = vunpack.c.h.b16 %v551
      %v603 = vunpack.c.l.b16 %v552
      %v604 = vunpack.c.h.b16 %v552
      %v605 = vunpack.c.l.b16 %v553
      %v606 = vunpack.c.h.b16 %v553
      %v607 = vunpack.c.l.b16 %v554
      %v608 = vunpack.c.h.b16 %v554
      %v609 = vunpack.c.l.b16 %v555
      %v610 = vunpack.c.h.b16 %v555
      %v611 = vunpack.c.l.b16 %v556
      %v612 = vunpack.c.h.b16 %v556
      %v613 = vunpack.c.l.b16 %v557
      %v614 = vunpack.c.h.b16 %v557
      %v615 = vunpack.c.l.b16 %v558
      %v616 = vunpack.c.h.b16 %v558
      %v617 = vunpack.c.l.b16 %v559
      %v618 = vunpack.c.h.b16 %v559
      %v619 = vunpack.c.l.b16 %v560
      %v620 = vunpack.c.h.b16 %v560
      %v621 = vunpack.c.l.b16 %v561
      %v622 = vunpack.c.h.b16 %v561
      %v623 = vunpack.c.l.b16 %v562
      %v624 = vunpack.c.h.b16 %v562
      %v625 = vunpack.c.l.b16 %v563
      %v626 = vunpack.c.h.b16 %v563
      %v627 = vunpack.c.l.b16 %v564
      %v628 = vunpack.c.h.b16 %v564
      %v629 = vunpack.c.l.b16 %v565
      %v630 = vunpack.c.h.b16 %v565
      %v631 = vunpack.c.l.b16 %v566
      %v632 = vunpack.c.h.b16 %v566
      %v633 = vpack.c.b16 %v591, %v589
      %v634 = vpack.c.b16 %v592, %v590
      %v635 = vpack.c.b16 %v595, %v593
      %v636 = vpack.c.b16 %v596, %v594
      %v637 = vpack.c.b16 %v599, %v597
      %v638 = vpack.c.b16 %v600, %v598
      %v639 = vpack.c.b16 %v603, %v601
      %v640 = vpack.c.b16 %v604, %v602
      %v641 = vpack.c.b16 %v607, %v605
      %v642 = vpack.c.b16 %v608, %v606
      %v643 = vpack.c.b16 %v611, %v609
      %v644 = vpack.c.b16 %v612, %v610
      %v645 = vpack.c.b16 %v615, %v613
      %v646 = vpack.c.b16 %v616, %v614
      %v647 = vpack.c.b16 %v619, %v617
      %v648 = vpack.c.b16 %v620, %v618
      %v649 = vpack.c.b16 %v623, %v621
      %v650 = vpack.c.b16 %v624, %v622
      %v651 = vpack.c.b16 %v627, %v625
      %v652 = vpack.c.b16 %v628, %v626
      %v653 = vpack.c.b16 %v631, %v629
      %v654 = vpack.c.b16 %v632, %v630
      %vm677 = vcmask 392192
      %v679 = vsel %vm677, %v544, 0
      %681 = vmatprep.subr.bf16.mxu0 %v634
      %682 = vmatpush1.bf16.msra.mxu0 %v633
      %683 = vmatprep.subr.bf16.mxu0 %v636
      %684 = vmatpush1.bf16.msra.mxu0 %v635
      %685 = vmatprep.subr.bf16.mxu0 %v638
      %686 = vmatpush1.bf16.msra.mxu0 %v637
      %687 = vmatprep.subr.bf16.mxu0 %v640
      %688 = vmatpush1.bf16.msra.mxu0 %v639
      %689 = vmatprep.subr.bf16.mxu0 %v642
      %690 = vmatpush1.bf16.msra.mxu0 %v641
      %691 = vmatprep.subr.bf16.mxu0 %v644
      %692 = vmatpush1.bf16.msra.mxu0 %v643
      %693 = vmatprep.subr.bf16.mxu0 %v646
      %694 = vmatpush1.bf16.msra.mxu0 %v645
      %695 = vmatprep.subr.bf16.mxu0 %v648
      %696 = vmatpush1.bf16.msra.mxu0 %v647
      %697 = vmatprep.subr.bf16.mxu0 %v650
      %698 = vmatpush1.bf16.msra.mxu0 %v649
      %699 = vmatprep.subr.bf16.mxu0 %v652
      %700 = vmatpush1.bf16.msra.mxu0 %v651
      %701 = vmatprep.subr.bf16.mxu0 %v654
      %702 = vmatpush1.bf16.msra.mxu0 %v653
      %703 = vmatprep.subr.bf16.mxu0 0
      %704 = vmatpush1.bf16.msra.mxu0 0
      %705 = vmatprep.subr.bf16.mxu0 0
      %706 = vmatpush1.bf16.msra.mxu0 0
      %707 = vmatprep.subr.bf16.mxu0 0
      %708 = vmatpush1.bf16.msra.mxu0 0
      %709 = vmatprep.subr.bf16.mxu0 0
      %710 = vmatpush1.bf16.msra.mxu0 0
      %711 = vmatprep.subr.bf16.mxu0 0
      %712 = vmatpush1.bf16.msra.mxu0 0
      %713 = vmatprep.mubr.bf16.mxu0 %v679
      %714 = vmatmul.mubr.bf16.gmra.mrb[0].mxu0 %v543
      %v715 = vpop.f32.mrb[0].mxu0
      %v716 = vadd.f32 0.0, %v715
      %v717 = vpop.f32.mrb[0].mxu0
      %v718 = vadd.f32 0.0, %v717
      %v719 = vpop.f32.mrb[0].mxu0
      %v720 = vadd.f32 0.0, %v719
      %v721 = vpop.f32.mrb[0].mxu0
      %v722 = vadd.f32 0.0, %v721
      %723 = vdwg.mxu0
      %v726 = vunpack.c.l.b16 %v412
      %v727 = vunpack.c.l.b16 %v413
      %v728 = vpack.c.b16 %v727, %v726
      %v733 = vunpack.c.l.b16 %v414
      %v734 = vunpack.c.h.b16 %v414
      %v735 = vunpack.c.l.b16 %v415
      %v736 = vunpack.c.h.b16 %v415
      %v737 = vunpack.c.l.b16 %v416
      %v738 = vunpack.c.h.b16 %v416
      %v739 = vunpack.c.l.b16 %v417
      %v740 = vunpack.c.h.b16 %v417
      %v741 = vpack.c.b16 %v735, %v733
      %v742 = vpack.c.b16 %v736, %v734
      %v743 = vpack.c.b16 %v739, %v737
      %v744 = vpack.c.b16 %v740, %v738
      %vm749 = vcmask 261120
      %v751 = vsel %vm749, %v728, 0
      %753 = vmatprep.subr.bf16.mxu0 %v742
      %754 = vmatpush1.bf16.msra.mxu0 %v741
      %755 = vmatprep.subr.bf16.mxu0 %v744
      %756 = vmatpush1.bf16.msra.mxu0 %v743
      %757 = vmatprep.subr.bf16.mxu0 0
      %758 = vmatpush1.bf16.msra.mxu0 0
      %759 = vmatprep.subr.bf16.mxu0 0
      %760 = vmatpush1.bf16.msra.mxu0 0
      %761 = vmatprep.subr.bf16.mxu0 0
      %762 = vmatpush1.bf16.msra.mxu0 0
      %763 = vmatprep.subr.bf16.mxu0 0
      %764 = vmatpush1.bf16.msra.mxu0 0
      %765 = vmatprep.subr.bf16.mxu0 0
      %766 = vmatpush1.bf16.msra.mxu0 0
      %767 = vmatprep.subr.bf16.mxu0 0
      %768 = vmatpush1.bf16.msra.mxu0 0
      %769 = vmatprep.subr.bf16.mxu0 0
      %770 = vmatpush1.bf16.msra.mxu0 0
      %771 = vmatprep.subr.bf16.mxu0 0
      %772 = vmatpush1.bf16.msra.mxu0 0
      %773 = vmatprep.subr.bf16.mxu0 0
      %774 = vmatpush1.bf16.msra.mxu0 0
      %775 = vmatprep.subr.bf16.mxu0 0
      %776 = vmatpush1.bf16.msra.mxu0 0
      %777 = vmatprep.subr.bf16.mxu0 0
      %778 = vmatpush1.bf16.msra.mxu0 0
      %779 = vmatprep.subr.bf16.mxu0 0
      %780 = vmatpush1.bf16.msra.mxu0 0
      %781 = vmatprep.subr.bf16.mxu0 0
      %782 = vmatpush1.bf16.msra.mxu0 0
      %783 = vmatprep.subr.bf16.mxu0 0
      %784 = vmatpush1.bf16.msra.mxu0 0
      %785 = vmatprep.mubr.bf16.mxu0 0
      %786 = vmatmul.mubr.bf16.gmra.mrb[0].mxu0 %v751
      %v787 = vpop.f32.mrb[0].mxu0
      %v788 = vadd.f32 %v716, %v787
      %v789 = vpop.f32.mrb[0].mxu0
      %v790 = vadd.f32 %v718, %v789
      %v791 = vpop.f32.mrb[0].mxu0
      %v792 = vadd.f32 %v720, %v791
      %v793 = vpop.f32.mrb[0].mxu0
      %v794 = vadd.f32 %v722, %v793
      %795 = vdwg.mxu0
      %v796 = vld [vmem:[%s393] sm:$0xff]
      %v797 = vld [vmem:[%s393 + $0x8] sm:$0xff]
      %799 = vset.pattern.permute.xlu0 0
      %800 = vperm.xlu0 %799, %v796
      %v801 = vpop.permute.xlu0 %800
      %804 = vset.pattern.permute.xlu0 0
      %805 = vperm.xlu0 %804, %v797
      %v806 = vpop.permute.xlu0 %805
      %v808 = vadd.f32 %v788, %v801
      %v809 = vadd.f32 %v790, %v801
      %v810 = vadd.f32 %v792, %v806
      %v811 = vadd.f32 %v794, %v806
      %v812 = vmax.f32 %v808, 0.0
      %v813 = vmax.f32 %v809, 0.0
      %v814 = vmax.f32 %v810, 0.0
      %v815 = vmax.f32 %v811, 0.0
      %816 = vst [vmem:[%s408] sm:$0xff] %v812
      %817 = vst [vmem:[%s408 + $0x8] sm:$0xff] %v813
      %818 = vst [vmem:[%s408 + $0x10] sm:$0xff] %v814
      %819 = vst [vmem:[%s408 + $0x18] sm:$0xff] %v815
      %s820 = smul.u32 2, %s23
      %s821 = smul.u32 2, %s24
      %p822 = scmp.lt.s32.totalorder %s22, 1
      %s823 = scalar_select %p822, %s22, 1
      %p824 = scmp.lt.s32.totalorder %s820, 1
      %s825 = scalar_select %p824, %s820, 1
      %p826 = scmp.lt.s32.totalorder %s821, 1
      %s827 = scalar_select %p826, %s821, 1
      %s828 = smul.addr %s825, 2
      %s829 = sadd.s32 %s827, %s828
      %s830 = smul.addr %s823, 4
      %s831 = sadd.s32 %s829, %s830
      %s832 = smul.addr %s831, 8
      %s833 = scalar_lea.vmem %s6, %s832
      // Predicated region
      $region45: #{spatial_pyramid_pooling.3} parent=43 // pred_check
        %p834 = pneg %p213
      $region46: #{spatial_pyramid_pooling.3} parent=43 // pred_check_branch
        %836 = sbr.rel (%p834) target = $region48
      $region47: #{spatial_pyramid_pooling.3} parent=43 // pred_region
        %s837 = smul.u32 2, %s23
        %s838 = smul.u32 2, %s24
      $region48: #{spatial_pyramid_pooling.3} parent=43 // pred_fallthru
        _
    $region44: #{spatial_pyramid_pooling.3} parent=5 // pred_fallthru
      _
    %p839 = scmp.le.s32.totalorder 2, %s12
    // Predicated region
    $region49: #{spatial_pyramid_pooling.3} parent=5 // pred_check
      %p840 = pneg %p839
    $region50: #{spatial_pyramid_pooling.3} parent=5 // pred_check_branch
      %842 = sbr.rel (%p840) target = $region52
    $region51: #{spatial_pyramid_pooling.3} parent=5 // pred_region
      %s843 = ssub.s32 %s12, 2
      // Predicated region
      $region53: #{spatial_pyramid_pooling.3} parent=51 // pred_check
        %p844 = pneg %p219
      $region54: #{spatial_pyramid_pooling.3} parent=51 // pred_check_branch
        %846 = sbr.rel (%p844) target = $region56
      $region55: #{spatial_pyramid_pooling.3} parent=51 // pred_region
        %s847 = smul.u32 2, %s26
        %s848 = smul.u32 2, %s27
        %p849 = scmp.lt.s32.totalorder %s25, 1
        %s850 = scalar_select %p849, %s25, 1
        %p851 = scmp.lt.s32.totalorder %s847, 1
        %s852 = scalar_select %p851, %s847, 1
        %p853 = scmp.lt.s32.totalorder %s848, 1
        %s854 = scalar_select %p853, %s848, 1
        %s855 = smul.addr %s852, 2
        %s856 = sadd.s32 %s854, %s855
        %s857 = smul.addr %s850, 4
        %s858 = sadd.s32 %s856, %s857
        %s859 = smul.addr %s858, 8
        %s860 = scalar_lea.vmem %s6, %s859
      $region56: #{spatial_pyramid_pooling.3} parent=51 // pred_fallthru
        _
    $region52: #{spatial_pyramid_pooling.3} parent=5 // pred_fallthru
      _
  $region6: #{spatial_pyramid_pooling.3} parent=0 // loop_footer
    %s16 = sadd.s32 1, %s12
  $region7: #{spatial_pyramid_pooling.3} parent=0 // loop_footer_branch
    %11 = sbr.rel target = $region3
  $region8: #{spatial_pyramid_pooling.3} parent=0 // loop_exit
    _

</llo_original>
